<compile_context>
chip_gen: v7x
topology: tpu7x:2x2x1
jax: 0.10.0
libtpu: 0.0.40
codegen_flags: <defaults>
</compile_context>

<pallas_src>
import functools

import jax
import jax.numpy as jnp
from jax.experimental import pallas as pl
from jax.experimental.pallas import tpu as pltpu


# ----------------------------------------------------------------------------
# Helpers
# ----------------------------------------------------------------------------
def _round_up(x, m):
    return (x + m - 1) // m * m


def _device_kind():
    try:
        return jax.devices()[0].device_kind.lower()
    except Exception:  # pragma: no cover - conservative fallback
        return ""


def _pick_tile_p(p_pad):
    """npoint tile on lanes: 128-dense when possible, else full extent."""
    if p_pad >= 128 and p_pad % 128 == 0:
        return 128
    return p_pad
    # TODO(synk): on v7x (2 TCs) with B==1 and p_pad==128 the grid has a single
    # parallel unit; a c_last split would keep both cores busy.


def _pick_s_chunk(S, c_in, tile_p, num_layers):
    """nsample chunk per grid step.

    Per-step live intermediates are only (C_out, tile_p) (the MLP runs per
    s-slice), so s_chunk mainly trades input-block size / number of grid steps
    against the number of unrolled matmuls per step.
    """
    max_unroll = max(4, 48 // max(num_layers, 1))
    byte_cap = 2 * 1024 * 1024  # keep each grouped-feature block <= 2 MiB
    per_s_bytes = max(1, _round_up(c_in, 16) * tile_p * 2)  # bf16
    cap = max(1, min(max_unroll, byte_cap // per_s_bytes))
    best = 1
    for d in range(1, S + 1):
        if S % d == 0 and d <= cap:
            best = d
    return best


# ----------------------------------------------------------------------------
# Pallas kernel: fused MLP (1x1 convs + folded BN + ReLU) + running max over
# nsample chunks, channel-major (npoint on lanes).
# Grid = (B, P_tiles, S_chunks); S axis is the reduction.
# ----------------------------------------------------------------------------
def _make_mlp_max_kernel(num_layers, s_chunk):
    def kernel(x_ref, off_ref, *rest):
        acc_ref = rest[-1]          # VMEM scratch (c_last, tile_p) f32
        out_ref = rest[-2]          # (1, c_last, tile_p)
        wrefs = rest[:-2]           # interleaved (W^T bf16, b f32) per layer
        s_idx = pl.program_id(2)

        @pl.when(s_idx == 0)
        def _init():
            # Safe because every layer ends in ReLU (block maxes >= 0).
            acc_ref[...] = jnp.full(acc_ref.shape, -jnp.inf, dtype=acc_ref.dtype)

        off = off_ref[0]                                  # (C, tile_p) bf16
        # Hoist weight/bias loads out of the s loop (loaded once per step).
        ws = [wrefs[2 * l][...] for l in range(num_layers)]       # (Co, Ci) bf16
        bs = [wrefs[2 * l + 1][...] for l in range(num_layers)]   # (Co, 1) f32

        blk_max = None
        for s in range(s_chunk):
            # (C, tile_p) slice along the leading (untiled) block dim: free.
            h = x_ref[0, s] - off                          # center xyz channels
            hf = None
            for l in range(num_layers):
                hf = jnp.dot(ws[l], h, preferred_element_type=jnp.float32)
                hf = jnp.maximum(hf + bs[l], 0.0)          # bias + ReLU in f32
                if l + 1 < num_layers:
                    h = hf.astype(jnp.bfloat16)
            blk_max = hf if blk_max is None else jnp.maximum(blk_max, hf)

        acc_ref[...] = jnp.maximum(acc_ref[...], blk_max)

        @pl.when(s_idx == pl.num_programs(2) - 1)
        def _finalize():
            # Accumulator is already (c_last, tile_p): lane-dense channels-first
            # write with no transpose.
            out_ref[0] = acc_ref[...].astype(out_ref.dtype)

    return kernel


def mlp_max_pallas(x, off, params):
    """x:   (B, S, C, Pp) bf16 grouped features, channel-major per point tile.
    off:  (B, C, Pp) bf16 per-(b, p) centering offsets (zeros where unused).
    params: list of (W (Ci, Co) f32, b (Co,) f32), BN already folded.
    Returns (B, C_last, Pp) f32 — matches the PyTorch output layout."""
    B, S, C, Pp = x.shape
    num_layers = len(params)
    c_last = params[-1][0].shape[1]

    is_v7x = "v7" in _device_kind()
    tile_p = _pick_tile_p(Pp)
    n_p = Pp // tile_p
    s_chunk = _pick_s_chunk(S, C, tile_p, num_layers)
    n_s = S // s_chunk
    n_steps = B * n_p * n_s

    x_block_bytes = s_chunk * _round_up(C, 16) * tile_p * 2

    def _x_spec():
        shape = (1, s_chunk, C, tile_p)
        idx_map = lambda b, p, s: (b, s, 0, p)
        if x_block_bytes <= 256 * 1024 and n_steps >= 4:
            try:
                # Extra pipeline depth for tiny per-step DMAs (perf review).
                return pl.BlockSpec(shape, idx_map, pipeline_mode=pl.Buffered(3))
            except TypeError:
                pass
        return pl.BlockSpec(shape, idx_map)

    in_specs = [
        _x_spec(),
        pl.BlockSpec((1, C, tile_p), lambda b, p, s: (b, 0, p)),
    ]
    args = [x, off]
    for W, bias in params:
        Wt = jnp.transpose(W).astype(jnp.bfloat16)           # (Co, Ci), BN folded
        bcol = jnp.reshape(bias, (-1, 1)).astype(jnp.float32)  # (Co, 1)
        in_specs.append(pl.BlockSpec(Wt.shape, lambda b, p, s: (0, 0)))
        in_specs.append(pl.BlockSpec(bcol.shape, lambda b, p, s: (0, 0)))
        args.append(Wt)
        args.append(bcol)

    out_spec = pl.BlockSpec((1, c_last, tile_p), lambda b, p, s: (b, 0, p))

    # v5e/v6e: 128 MiB physical VMEM -> 64 MiB scoped limit; v7x: 64 MiB
    # physical -> stay at 32 MiB.  Per-step footprint here is small anyway.
    vmem_limit = (32 if is_v7x else 64) * 1024 * 1024

    return pl.pallas_call(
        _make_mlp_max_kernel(num_layers, s_chunk),
        out_shape=jax.ShapeDtypeStruct((B, c_last, Pp), jnp.float32),
        grid=(B, n_p, n_s),
        in_specs=in_specs,
        out_specs=out_spec,
        scratch_shapes=[pltpu.VMEM((c_last, tile_p), jnp.float32)],
        compiler_params=pltpu.CompilerParams(
            dimension_semantics=("parallel", "parallel", "arbitrary"),
            vmem_limit_bytes=vmem_limit),
    )(*args)


# ----------------------------------------------------------------------------
# Plain-JAX glue: furthest point sampling, ball query (data-dependent, kept
# outside the Pallas kernel).
# ----------------------------------------------------------------------------
def _fps_one(xyz_f, npoint):
    """xyz_f: (N, 3) -> (npoint,) int32 indices. Matches pointnet2 FPS."""
    N = xyz_f.shape[0]

    def body(i, carry):
        idxs, dists, last = carry
        d = jnp.sum((xyz_f - xyz_f[last]) ** 2, axis=-1)
        dists = jnp.minimum(dists, d)
        nxt = jnp.argmax(dists).astype(jnp.int32)
        idxs = idxs.at[i].set(nxt)
        return idxs, dists, nxt

    idxs0 = jnp.zeros((npoint,), jnp.int32)
    dists0 = jnp.full((N,), 1e10, jnp.float32)
    idxs, _, _ = jax.lax.fori_loop(1, npoint, body,
                                   (idxs0, dists0, jnp.int32(0)))
    return idxs


def _ball_query_one(xyz_f, new_xyz_f, radius, nsample):
    """xyz_f: (N,3), new_xyz_f: (npoint,3) -> (npoint, nsample) int32.

    Matches pointnet2 ball_query: first nsample points (in index order) within
    radius; remaining slots filled with the first found index (falls back to
    index 0 when a row has no in-radius neighbor).
    """
    N = xyz_f.shape[0]
    d2 = jnp.sum((new_xyz_f[:, None, :] - xyz_f[None, :, :]) ** 2, axis=-1)
    mask = d2 < radius * radius  # (npoint, N)

    def per_row(mrow):
        rank = jnp.cumsum(mrow.astype(jnp.int32)) - 1
        valid = mrow & (rank < nsample)
        slots = jnp.where(valid, rank, nsample)
        out = jnp.full((nsample + 1,), -1, jnp.int32)
        out = out.at[slots].set(jnp.arange(N, dtype=jnp.int32))
        out = out[:nsample]
        first = jnp.where(out[0] < 0, 0, out[0])
        return jnp.where(out < 0, first, out)

    return jax.vmap(per_row)(mask)


# ----------------------------------------------------------------------------
# PointNet_SA_Module forward
# ----------------------------------------------------------------------------
def pointnet_sa_module(xyz, points, params, *, npoint, nsample, radius,
                       use_xyz=True, group_all=False):
    """
    xyz:    (B, 3, N) float32
    points: (B, f, N) float32 or None
    Returns new_xyz (B, 3, npoint), new_points (B, mlp[-1], npoint)
    """
    B, _, N = xyz.shape

    if group_all:
        # MLP per point (S=1, P=N, lane-dense), max over all N points in XLA.
        new_xyz = jnp.zeros((B, 3, 1), jnp.float32)
        if points is not None:
            feat_cm = (jnp.concatenate([xyz, points], axis=1)
                       if use_xyz else points)
        else:
            feat_cm = xyz
        C = feat_cm.shape[1]
        x = feat_cm.astype(jnp.bfloat16)[:, None, :, :]          # (B, 1, C, N)
        off = jnp.zeros((B, C, N), jnp.bfloat16)
        per_point = mlp_max_pallas(x, off, params)               # (B, c_last, N)
        new_points = jnp.max(per_point, axis=-1, keepdims=True)  # (B, c_last, 1)
        return new_xyz, new_points

    xyz_f = jnp.transpose(xyz, (0, 2, 1))                        # (B, N, 3)
    fps_idx = jax.vmap(functools.partial(_fps_one, npoint=npoint))(xyz_f)
    new_xyz_f = jax.vmap(lambda p, i: p[i])(xyz_f, fps_idx)      # (B, npoint, 3)
    new_xyz = jnp.transpose(new_xyz_f, (0, 2, 1))                # (B, 3, npoint)
    idx = jax.vmap(
        functools.partial(_ball_query_one, radius=radius, nsample=nsample)
    )(xyz_f, new_xyz_f)                                          # (B, npoint, nsample)

    if points is not None:
        feat_cm = (jnp.concatenate([xyz, points], axis=1)
                   if use_xyz else points)                        # (B, C, N)
    else:
        feat_cm = xyz
    C = feat_cm.shape[1]
    center = (points is None) or use_xyz

    # bf16 BEFORE the gather: the nsample-duplicated tensor is produced and
    # consumed in bf16 (one HBM write + one read).
    feat_b = feat_cm.astype(jnp.bfloat16)                        # (B, C, N)

    P = npoint
    p_pad = _round_up(P, 128) if P >= 128 else P
    idx_pad = idx if p_pad == P else jnp.pad(
        idx, ((0, 0), (0, p_pad - P), (0, 0)))                   # pad with idx 0
    idx_t = jnp.swapaxes(idx_pad, 1, 2)                          # (B, S, p_pad)

    # Channel-major grouping gather -> (B, S, C, p_pad): npoint on lanes inside
    # the kernel, no channels-last lane padding, no post-kernel transpose.
    def _group_one(feat_b_b, idx_t_b):
        return jax.vmap(lambda j: feat_b_b[:, j])(idx_t_b)       # (S, C, p_pad)

    x = jax.vmap(_group_one)(feat_b, idx_t)                      # (B, S, C, p_pad)

    # xyz centering moved in-kernel as a tiny per-(b, p) offset (avoids an
    # extra read-modify-write pass over the duplicated tensor).
    if center:
        nx = jnp.transpose(new_xyz_f, (0, 2, 1))                 # (B, 3, P)
        if p_pad != P:
            nx = jnp.pad(nx, ((0, 0), (0, 0), (0, p_pad - P)))
        off = jnp.concatenate(
            [nx, jnp.zeros((B, C - 3, p_pad), nx.dtype)], axis=1)
    else:
        off = jnp.zeros((B, C, p_pad), jnp.float32)
    off = off.astype(jnp.bfloat16)

    new_points = mlp_max_pallas(x, off, params)                  # (B, c_last, p_pad)
    if p_pad != P:
        # Padded npoint columns hold finite garbage (ReLU of gathered point 0);
        # they are sliced off before any consumer sees them.
        new_points = new_points[:, :, :P]
    return new_xyz, new_points


# ----------------------------------------------------------------------------
# Deterministic parameter init (Conv2d 1x1 weights/bias + BN folded, eval mode)
# ----------------------------------------------------------------------------
def init_params(key, in_channel, mlp):
    eps = 1e-5
    params = []
    c_in = in_channel
    for c_out in mlp:
        key, kw, kb = jax.random.split(key, 3)
        W = jax.random.normal(kw, (c_in, c_out), jnp.float32) * 0.1
        bias = jax.random.normal(kb, (c_out,), jnp.float32) * 0.1
        # BN (eval): gamma=1, beta=0, running_mean=0, running_var=1
        scale = 1.0 / jnp.sqrt(1.0 + eps)
        params.append((W * scale, bias * scale))
        c_in = c_out
    return params


if __name__ == "__main__":
    B, N, f = 2, 16, 4
    npoint, nsample, radius = 8, 8, 0.4
    mlp = [16, 32]
    use_xyz = True

    key = jax.random.PRNGKey(0)
    kx, kp, kw = jax.random.split(key, 3)
    xyz = jax.random.uniform(kx, (B, 3, N), jnp.float32)
    points = jax.random.normal(kp, (B, f, N), jnp.float32)

    in_channel = f + (3 if use_xyz else 0)
    params = init_params(kw, in_channel, mlp)

    new_xyz, new_points = pointnet_sa_module(
        xyz, points, params,
        npoint=npoint, nsample=nsample, radius=radius,
        use_xyz=use_xyz, group_all=False)

    jax.block_until_ready((new_xyz, new_points))
    assert new_xyz.shape == (B, 3, npoint), new_xyz.shape
    assert new_points.shape == (B, mlp[-1], npoint), new_points.shape
    assert bool(jnp.all(jnp.isfinite(new_points)))
    print("KERNEL_OK")
</pallas_src>

<mosaic_0001>
module attributes {stable_mosaic.version = 11 : i64} {
  func.func @kernel(%arg0: i32, %arg1: i32, %arg2: i32, %arg3: memref<1x8x7x8xbf16, #tpu.memory_space<vmem>>, %arg4: memref<1x7x8xbf16, #tpu.memory_space<vmem>>, %arg5: memref<16x7xbf16, #tpu.memory_space<vmem>>, %arg6: memref<16x1xf32, #tpu.memory_space<vmem>>, %arg7: memref<32x16xbf16, #tpu.memory_space<vmem>>, %arg8: memref<32x1xf32, #tpu.memory_space<vmem>>, %arg9: memref<1x32x8xf32, #tpu.memory_space<vmem>>, %arg10: memref<32x8xf32, #tpu.memory_space<vmem>>) attributes {dimension_semantics = [#tpu.dimension_semantics<parallel>, #tpu.dimension_semantics<parallel>, #tpu.dimension_semantics<arbitrary>], iteration_bounds = array<i64: 2, 1, 1>, scalar_prefetch = 0 : i64, scratch_operands = 1 : i64, tpu.core_type = #tpu.core_type<tc>, window_params = [{transform_indices = @transform_0, window_bounds = array<i64: 1, 8, 7, 8>}, {transform_indices = @transform_1, window_bounds = array<i64: 1, 7, 8>}, {pipeline_mode = #tpu.pipeline_mode<synchronous>, transform_indices = @transform_2, window_bounds = array<i64: 16, 7>}, {pipeline_mode = #tpu.pipeline_mode<synchronous>, transform_indices = @transform_3, window_bounds = array<i64: 16, 1>}, {pipeline_mode = #tpu.pipeline_mode<synchronous>, transform_indices = @transform_4, window_bounds = array<i64: 32, 16>}, {pipeline_mode = #tpu.pipeline_mode<synchronous>, transform_indices = @transform_5, window_bounds = array<i64: 32, 1>}, {transform_indices = @transform_6, window_bounds = array<i64: 1, 32, 8>}]} {
    %c0_i32 = arith.constant 0 : i32
    %0 = arith.cmpi eq, %arg2, %c0_i32 : i32
    %1 = arith.extui %0 : i1 to i32
    %c0_i32_0 = arith.constant 0 : i32
    %2 = arith.cmpi ne, %1, %c0_i32_0 : i32
    scf.if %2 {
      %cst_73 = arith.constant 0xFF800000 : f32
      %134 = vector.broadcast %cst_73 : f32 to vector<32x8xf32>
      %c0_74 = arith.constant 0 : index
      %c0_75 = arith.constant 0 : index
      %135 = vector.load %arg10[%c0_74, %c0_75] : memref<32x8xf32, #tpu.memory_space<vmem>>, vector<32x8xf32>
      tpu.vector_store %arg10[%c0_74, %c0_75], %134 {strides = array<i32>} : memref<32x8xf32, #tpu.memory_space<vmem>>, vector<32x8xf32>,
    } else {
    }
    %c0 = arith.constant 0 : index
    %c0_1 = arith.constant 0 : index
    %c0_2 = arith.constant 0 : index
    %3 = vector.load %arg4[%c0, %c0_1, %c0_2] : memref<1x7x8xbf16, #tpu.memory_space<vmem>>, vector<1x7x8xbf16>
    %4 = vector.shape_cast %3 : vector<1x7x8xbf16> to vector<7x8xbf16>
    %c0_3 = arith.constant 0 : index
    %c0_4 = arith.constant 0 : index
    %5 = vector.load %arg5[%c0_3, %c0_4] : memref<16x7xbf16, #tpu.memory_space<vmem>>, vector<16x7xbf16>
    %c0_5 = arith.constant 0 : index
    %c0_6 = arith.constant 0 : index
    %6 = vector.load %arg7[%c0_5, %c0_6] : memref<32x16xbf16, #tpu.memory_space<vmem>>, vector<32x16xbf16>
    %c0_7 = arith.constant 0 : index
    %c0_8 = arith.constant 0 : index
    %7 = vector.load %arg6[%c0_7, %c0_8] : memref<16x1xf32, #tpu.memory_space<vmem>>, vector<16x1xf32>
    %c0_9 = arith.constant 0 : index
    %c0_10 = arith.constant 0 : index
    %8 = vector.load %arg8[%c0_9, %c0_10] : memref<32x1xf32, #tpu.memory_space<vmem>>, vector<32x1xf32>
    %c0_11 = arith.constant 0 : index
    %c0_12 = arith.constant 0 : index
    %c0_13 = arith.constant 0 : index
    %c0_14 = arith.constant 0 : index
    %9 = vector.load %arg3[%c0_11, %c0_12, %c0_13, %c0_14] : memref<1x8x7x8xbf16, #tpu.memory_space<vmem>>, vector<1x1x7x8xbf16>
    %10 = vector.shape_cast %9 : vector<1x1x7x8xbf16> to vector<7x8xbf16>
    %11 = arith.subf %10, %4 : vector<7x8xbf16>
    %cst = arith.constant dense<0.000000e+00> : vector<16x8xf32>
    %12 = tpu.matmul %5, %11, %cst {dimension_numbers = #tpu.dot_dimension_numbers<[1], [0], [0], [1], [0, 0, 1, 1], [], []>} : vector<16x7xbf16>, vector<7x8xbf16>, vector<16x8xf32> -> vector<16x8xf32>
    %13 = vector.broadcast %7 : vector<16x1xf32> to vector<16x8xf32>
    %14 = arith.addf %12, %13 : vector<16x8xf32>
    %cst_15 = arith.constant 0.000000e+00 : f32
    %15 = vector.broadcast %cst_15 : f32 to vector<16x8xf32>
    %16 = arith.maximumf %14, %15 : vector<16x8xf32>
    %17 = arith.truncf %16 : vector<16x8xf32> to vector<16x8xbf16>
    %cst_16 = arith.constant dense<0.000000e+00> : vector<32x8xf32>
    %18 = tpu.matmul %6, %17, %cst_16 {dimension_numbers = #tpu.dot_dimension_numbers<[1], [0], [0], [1], [0, 0, 1, 1], [], []>} : vector<32x16xbf16>, vector<16x8xbf16>, vector<32x8xf32> -> vector<32x8xf32>
    %19 = vector.broadcast %8 : vector<32x1xf32> to vector<32x8xf32>
    %20 = arith.addf %18, %19 : vector<32x8xf32>
    %cst_17 = arith.constant 0.000000e+00 : f32
    %21 = vector.broadcast %cst_17 : f32 to vector<32x8xf32>
    %22 = arith.maximumf %20, %21 : vector<32x8xf32>
    %c0_18 = arith.constant 0 : index
    %c1 = arith.constant 1 : index
    %c0_19 = arith.constant 0 : index
    %c0_20 = arith.constant 0 : index
    %23 = vector.load %arg3[%c0_18, %c1, %c0_19, %c0_20] : memref<1x8x7x8xbf16, #tpu.memory_space<vmem>>, vector<1x1x7x8xbf16>
    %24 = vector.shape_cast %23 : vector<1x1x7x8xbf16> to vector<7x8xbf16>
    %25 = arith.subf %24, %4 : vector<7x8xbf16>
    %cst_21 = arith.constant dense<0.000000e+00> : vector<16x8xf32>
    %26 = tpu.matmul %5, %25, %cst_21 {dimension_numbers = #tpu.dot_dimension_numbers<[1], [0], [0], [1], [0, 0, 1, 1], [], []>} : vector<16x7xbf16>, vector<7x8xbf16>, vector<16x8xf32> -> vector<16x8xf32>
    %27 = vector.broadcast %7 : vector<16x1xf32> to vector<16x8xf32>
    %28 = arith.addf %26, %27 : vector<16x8xf32>
    %cst_22 = arith.constant 0.000000e+00 : f32
    %29 = vector.broadcast %cst_22 : f32 to vector<16x8xf32>
    %30 = arith.maximumf %28, %29 : vector<16x8xf32>
    %31 = arith.truncf %30 : vector<16x8xf32> to vector<16x8xbf16>
    %cst_23 = arith.constant dense<0.000000e+00> : vector<32x8xf32>
    %32 = tpu.matmul %6, %31, %cst_23 {dimension_numbers = #tpu.dot_dimension_numbers<[1], [0], [0], [1], [0, 0, 1, 1], [], []>} : vector<32x16xbf16>, vector<16x8xbf16>, vector<32x8xf32> -> vector<32x8xf32>
    %33 = vector.broadcast %8 : vector<32x1xf32> to vector<32x8xf32>
    %34 = arith.addf %32, %33 : vector<32x8xf32>
    %cst_24 = arith.constant 0.000000e+00 : f32
    %35 = vector.broadcast %cst_24 : f32 to vector<32x8xf32>
    %36 = arith.maximumf %34, %35 : vector<32x8xf32>
    %37 = arith.maximumf %22, %36 : vector<32x8xf32>
    %c0_25 = arith.constant 0 : index
    %c2 = arith.constant 2 : index
    %c0_26 = arith.constant 0 : index
    %c0_27 = arith.constant 0 : index
    %38 = vector.load %arg3[%c0_25, %c2, %c0_26, %c0_27] : memref<1x8x7x8xbf16, #tpu.memory_space<vmem>>, vector<1x1x7x8xbf16>
    %39 = vector.shape_cast %38 : vector<1x1x7x8xbf16> to vector<7x8xbf16>
    %40 = arith.subf %39, %4 : vector<7x8xbf16>
    %cst_28 = arith.constant dense<0.000000e+00> : vector<16x8xf32>
    %41 = tpu.matmul %5, %40, %cst_28 {dimension_numbers = #tpu.dot_dimension_numbers<[1], [0], [0], [1], [0, 0, 1, 1], [], []>} : vector<16x7xbf16>, vector<7x8xbf16>, vector<16x8xf32> -> vector<16x8xf32>
    %42 = vector.broadcast %7 : vector<16x1xf32> to vector<16x8xf32>
    %43 = arith.addf %41, %42 : vector<16x8xf32>
    %cst_29 = arith.constant 0.000000e+00 : f32
    %44 = vector.broadcast %cst_29 : f32 to vector<16x8xf32>
    %45 = arith.maximumf %43, %44 : vector<16x8xf32>
    %46 = arith.truncf %45 : vector<16x8xf32> to vector<16x8xbf16>
    %cst_30 = arith.constant dense<0.000000e+00> : vector<32x8xf32>
    %47 = tpu.matmul %6, %46, %cst_30 {dimension_numbers = #tpu.dot_dimension_numbers<[1], [0], [0], [1], [0, 0, 1, 1], [], []>} : vector<32x16xbf16>, vector<16x8xbf16>, vector<32x8xf32> -> vector<32x8xf32>
    %48 = vector.broadcast %8 : vector<32x1xf32> to vector<32x8xf32>
    %49 = arith.addf %47, %48 : vector<32x8xf32>
    %cst_31 = arith.constant 0.000000e+00 : f32
    %50 = vector.broadcast %cst_31 : f32 to vector<32x8xf32>
    %51 = arith.maximumf %49, %50 : vector<32x8xf32>
    %52 = arith.maximumf %37, %51 : vector<32x8xf32>
    %c0_32 = arith.constant 0 : index
    %c3 = arith.constant 3 : index
    %c0_33 = arith.constant 0 : index
    %c0_34 = arith.constant 0 : index
    %53 = vector.load %arg3[%c0_32, %c3, %c0_33, %c0_34] : memref<1x8x7x8xbf16, #tpu.memory_space<vmem>>, vector<1x1x7x8xbf16>
    %54 = vector.shape_cast %53 : vector<1x1x7x8xbf16> to vector<7x8xbf16>
    %55 = arith.subf %54, %4 : vector<7x8xbf16>
    %cst_35 = arith.constant dense<0.000000e+00> : vector<16x8xf32>
    %56 = tpu.matmul %5, %55, %cst_35 {dimension_numbers = #tpu.dot_dimension_numbers<[1], [0], [0], [1], [0, 0, 1, 1], [], []>} : vector<16x7xbf16>, vector<7x8xbf16>, vector<16x8xf32> -> vector<16x8xf32>
    %57 = vector.broadcast %7 : vector<16x1xf32> to vector<16x8xf32>
    %58 = arith.addf %56, %57 : vector<16x8xf32>
    %cst_36 = arith.constant 0.000000e+00 : f32
    %59 = vector.broadcast %cst_36 : f32 to vector<16x8xf32>
    %60 = arith.maximumf %58, %59 : vector<16x8xf32>
    %61 = arith.truncf %60 : vector<16x8xf32> to vector<16x8xbf16>
    %cst_37 = arith.constant dense<0.000000e+00> : vector<32x8xf32>
    %62 = tpu.matmul %6, %61, %cst_37 {dimension_numbers = #tpu.dot_dimension_numbers<[1], [0], [0], [1], [0, 0, 1, 1], [], []>} : vector<32x16xbf16>, vector<16x8xbf16>, vector<32x8xf32> -> vector<32x8xf32>
    %63 = vector.broadcast %8 : vector<32x1xf32> to vector<32x8xf32>
    %64 = arith.addf %62, %63 : vector<32x8xf32>
    %cst_38 = arith.constant 0.000000e+00 : f32
    %65 = vector.broadcast %cst_38 : f32 to vector<32x8xf32>
    %66 = arith.maximumf %64, %65 : vector<32x8xf32>
    %67 = arith.maximumf %52, %66 : vector<32x8xf32>
    %c0_39 = arith.constant 0 : index
    %c4 = arith.constant 4 : index
    %c0_40 = arith.constant 0 : index
    %c0_41 = arith.constant 0 : index
    %68 = vector.load %arg3[%c0_39, %c4, %c0_40, %c0_41] : memref<1x8x7x8xbf16, #tpu.memory_space<vmem>>, vector<1x1x7x8xbf16>
    %69 = vector.shape_cast %68 : vector<1x1x7x8xbf16> to vector<7x8xbf16>
    %70 = arith.subf %69, %4 : vector<7x8xbf16>
    %cst_42 = arith.constant dense<0.000000e+00> : vector<16x8xf32>
    %71 = tpu.matmul %5, %70, %cst_42 {dimension_numbers = #tpu.dot_dimension_numbers<[1], [0], [0], [1], [0, 0, 1, 1], [], []>} : vector<16x7xbf16>, vector<7x8xbf16>, vector<16x8xf32> -> vector<16x8xf32>
    %72 = vector.broadcast %7 : vector<16x1xf32> to vector<16x8xf32>
    %73 = arith.addf %71, %72 : vector<16x8xf32>
    %cst_43 = arith.constant 0.000000e+00 : f32
    %74 = vector.broadcast %cst_43 : f32 to vector<16x8xf32>
    %75 = arith.maximumf %73, %74 : vector<16x8xf32>
    %76 = arith.truncf %75 : vector<16x8xf32> to vector<16x8xbf16>
    %cst_44 = arith.constant dense<0.000000e+00> : vector<32x8xf32>
    %77 = tpu.matmul %6, %76, %cst_44 {dimension_numbers = #tpu.dot_dimension_numbers<[1], [0], [0], [1], [0, 0, 1, 1], [], []>} : vector<32x16xbf16>, vector<16x8xbf16>, vector<32x8xf32> -> vector<32x8xf32>
    %78 = vector.broadcast %8 : vector<32x1xf32> to vector<32x8xf32>
    %79 = arith.addf %77, %78 : vector<32x8xf32>
    %cst_45 = arith.constant 0.000000e+00 : f32
    %80 = vector.broadcast %cst_45 : f32 to vector<32x8xf32>
    %81 = arith.maximumf %79, %80 : vector<32x8xf32>
    %82 = arith.maximumf %67, %81 : vector<32x8xf32>
    %c0_46 = arith.constant 0 : index
    %c5 = arith.constant 5 : index
    %c0_47 = arith.constant 0 : index
    %c0_48 = arith.constant 0 : index
    %83 = vector.load %arg3[%c0_46, %c5, %c0_47, %c0_48] : memref<1x8x7x8xbf16, #tpu.memory_space<vmem>>, vector<1x1x7x8xbf16>
    %84 = vector.shape_cast %83 : vector<1x1x7x8xbf16> to vector<7x8xbf16>
    %85 = arith.subf %84, %4 : vector<7x8xbf16>
    %cst_49 = arith.constant dense<0.000000e+00> : vector<16x8xf32>
    %86 = tpu.matmul %5, %85, %cst_49 {dimension_numbers = #tpu.dot_dimension_numbers<[1], [0], [0], [1], [0, 0, 1, 1], [], []>} : vector<16x7xbf16>, vector<7x8xbf16>, vector<16x8xf32> -> vector<16x8xf32>
    %87 = vector.broadcast %7 : vector<16x1xf32> to vector<16x8xf32>
    %88 = arith.addf %86, %87 : vector<16x8xf32>
    %cst_50 = arith.constant 0.000000e+00 : f32
    %89 = vector.broadcast %cst_50 : f32 to vector<16x8xf32>
    %90 = arith.maximumf %88, %89 : vector<16x8xf32>
    %91 = arith.truncf %90 : vector<16x8xf32> to vector<16x8xbf16>
    %cst_51 = arith.constant dense<0.000000e+00> : vector<32x8xf32>
    %92 = tpu.matmul %6, %91, %cst_51 {dimension_numbers = #tpu.dot_dimension_numbers<[1], [0], [0], [1], [0, 0, 1, 1], [], []>} : vector<32x16xbf16>, vector<16x8xbf16>, vector<32x8xf32> -> vector<32x8xf32>
    %93 = vector.broadcast %8 : vector<32x1xf32> to vector<32x8xf32>
    %94 = arith.addf %92, %93 : vector<32x8xf32>
    %cst_52 = arith.constant 0.000000e+00 : f32
    %95 = vector.broadcast %cst_52 : f32 to vector<32x8xf32>
    %96 = arith.maximumf %94, %95 : vector<32x8xf32>
    %97 = arith.maximumf %82, %96 : vector<32x8xf32>
    %c0_53 = arith.constant 0 : index
    %c6 = arith.constant 6 : index
    %c0_54 = arith.constant 0 : index
    %c0_55 = arith.constant 0 : index
    %98 = vector.load %arg3[%c0_53, %c6, %c0_54, %c0_55] : memref<1x8x7x8xbf16, #tpu.memory_space<vmem>>, vector<1x1x7x8xbf16>
    %99 = vector.shape_cast %98 : vector<1x1x7x8xbf16> to vector<7x8xbf16>
    %100 = arith.subf %99, %4 : vector<7x8xbf16>
    %cst_56 = arith.constant dense<0.000000e+00> : vector<16x8xf32>
    %101 = tpu.matmul %5, %100, %cst_56 {dimension_numbers = #tpu.dot_dimension_numbers<[1], [0], [0], [1], [0, 0, 1, 1], [], []>} : vector<16x7xbf16>, vector<7x8xbf16>, vector<16x8xf32> -> vector<16x8xf32>
    %102 = vector.broadcast %7 : vector<16x1xf32> to vector<16x8xf32>
    %103 = arith.addf %101, %102 : vector<16x8xf32>
    %cst_57 = arith.constant 0.000000e+00 : f32
    %104 = vector.broadcast %cst_57 : f32 to vector<16x8xf32>
    %105 = arith.maximumf %103, %104 : vector<16x8xf32>
    %106 = arith.truncf %105 : vector<16x8xf32> to vector<16x8xbf16>
    %cst_58 = arith.constant dense<0.000000e+00> : vector<32x8xf32>
    %107 = tpu.matmul %6, %106, %cst_58 {dimension_numbers = #tpu.dot_dimension_numbers<[1], [0], [0], [1], [0, 0, 1, 1], [], []>} : vector<32x16xbf16>, vector<16x8xbf16>, vector<32x8xf32> -> vector<32x8xf32>
    %108 = vector.broadcast %8 : vector<32x1xf32> to vector<32x8xf32>
    %109 = arith.addf %107, %108 : vector<32x8xf32>
    %cst_59 = arith.constant 0.000000e+00 : f32
    %110 = vector.broadcast %cst_59 : f32 to vector<32x8xf32>
    %111 = arith.maximumf %109, %110 : vector<32x8xf32>
    %112 = arith.maximumf %97, %111 : vector<32x8xf32>
    %c0_60 = arith.constant 0 : index
    %c7 = arith.constant 7 : index
    %c0_61 = arith.constant 0 : index
    %c0_62 = arith.constant 0 : index
    %113 = vector.load %arg3[%c0_60, %c7, %c0_61, %c0_62] : memref<1x8x7x8xbf16, #tpu.memory_space<vmem>>, vector<1x1x7x8xbf16>
    %114 = vector.shape_cast %113 : vector<1x1x7x8xbf16> to vector<7x8xbf16>
    %115 = arith.subf %114, %4 : vector<7x8xbf16>
    %cst_63 = arith.constant dense<0.000000e+00> : vector<16x8xf32>
    %116 = tpu.matmul %5, %115, %cst_63 {dimension_numbers = #tpu.dot_dimension_numbers<[1], [0], [0], [1], [0, 0, 1, 1], [], []>} : vector<16x7xbf16>, vector<7x8xbf16>, vector<16x8xf32> -> vector<16x8xf32>
    %117 = vector.broadcast %7 : vector<16x1xf32> to vector<16x8xf32>
    %118 = arith.addf %116, %117 : vector<16x8xf32>
    %cst_64 = arith.constant 0.000000e+00 : f32
    %119 = vector.broadcast %cst_64 : f32 to vector<16x8xf32>
    %120 = arith.maximumf %118, %119 : vector<16x8xf32>
    %121 = arith.truncf %120 : vector<16x8xf32> to vector<16x8xbf16>
    %cst_65 = arith.constant dense<0.000000e+00> : vector<32x8xf32>
    %122 = tpu.matmul %6, %121, %cst_65 {dimension_numbers = #tpu.dot_dimension_numbers<[1], [0], [0], [1], [0, 0, 1, 1], [], []>} : vector<32x16xbf16>, vector<16x8xbf16>, vector<32x8xf32> -> vector<32x8xf32>
    %123 = vector.broadcast %8 : vector<32x1xf32> to vector<32x8xf32>
    %124 = arith.addf %122, %123 : vector<32x8xf32>
    %cst_66 = arith.constant 0.000000e+00 : f32
    %125 = vector.broadcast %cst_66 : f32 to vector<32x8xf32>
    %126 = arith.maximumf %124, %125 : vector<32x8xf32>
    %127 = arith.maximumf %112, %126 : vector<32x8xf32>
    %c0_67 = arith.constant 0 : index
    %c0_68 = arith.constant 0 : index
    %128 = vector.load %arg10[%c0_67, %c0_68] : memref<32x8xf32, #tpu.memory_space<vmem>>, vector<32x8xf32>
    %129 = arith.maximumf %128, %127 : vector<32x8xf32>
    %c0_69 = arith.constant 0 : index
    %c0_70 = arith.constant 0 : index
    %130 = vector.load %arg10[%c0_69, %c0_70] : memref<32x8xf32, #tpu.memory_space<vmem>>, vector<32x8xf32>
    tpu.vector_store %arg10[%c0_69, %c0_70], %129 {strides = array<i32>} : memref<32x8xf32, #tpu.memory_space<vmem>>, vector<32x8xf32>,
    %c0_i32_71 = arith.constant 0 : i32
    %131 = arith.cmpi eq, %arg2, %c0_i32_71 : i32
    %132 = arith.extui %131 : i1 to i32
    %c0_i32_72 = arith.constant 0 : i32
    %133 = arith.cmpi ne, %132, %c0_i32_72 : i32
    scf.if %133 {
      %c0_73 = arith.constant 0 : index
      %c0_74 = arith.constant 0 : index
      %134 = vector.load %arg10[%c0_73, %c0_74] : memref<32x8xf32, #tpu.memory_space<vmem>>, vector<32x8xf32>
      %c0_75 = arith.constant 0 : index
      %c0_76 = arith.constant 0 : index
      %c0_77 = arith.constant 0 : index
      %135 = vector.load %arg9[%c0_75, %c0_76, %c0_77] : memref<1x32x8xf32, #tpu.memory_space<vmem>>, vector<1x32x8xf32>
      %136 = vector.shape_cast %135 : vector<1x32x8xf32> to vector<32x8xf32>
      %137 = vector.shape_cast %134 : vector<32x8xf32> to vector<1x32x8xf32>
      tpu.vector_store %arg9[%c0_75, %c0_76, %c0_77], %137 {strides = array<i32>} : memref<1x32x8xf32, #tpu.memory_space<vmem>>, vector<1x32x8xf32>,
    } else {
    }
    return
  }
  func.func @transform_0(%arg0: i32, %arg1: i32, %arg2: i32) -> (i32, i32, i32, i32) {
    %c0_i32 = arith.constant 0 : i32
    %c0_i32_0 = arith.constant 0 : i32
    return %arg0, %arg2, %c0_i32, %arg1 : i32, i32, i32, i32
  }
  func.func @transform_1(%arg0: i32, %arg1: i32, %arg2: i32) -> (i32, i32, i32) {
    %c0_i32 = arith.constant 0 : i32
    %c0_i32_0 = arith.constant 0 : i32
    return %arg0, %c0_i32, %arg1 : i32, i32, i32
  }
  func.func @transform_2(%arg0: i32, %arg1: i32, %arg2: i32) -> (i32, i32) {
    %c0_i32 = arith.constant 0 : i32
    %c0_i32_0 = arith.constant 0 : i32
    %c0_i32_1 = arith.constant 0 : i32
    return %c0_i32, %c0_i32_0 : i32, i32
  }
  func.func @transform_3(%arg0: i32, %arg1: i32, %arg2: i32) -> (i32, i32) {
    %c0_i32 = arith.constant 0 : i32
    %c0_i32_0 = arith.constant 0 : i32
    %c0_i32_1 = arith.constant 0 : i32
    return %c0_i32, %c0_i32_0 : i32, i32
  }
  func.func @transform_4(%arg0: i32, %arg1: i32, %arg2: i32) -> (i32, i32) {
    %c0_i32 = arith.constant 0 : i32
    %c0_i32_0 = arith.constant 0 : i32
    %c0_i32_1 = arith.constant 0 : i32
    return %c0_i32, %c0_i32_0 : i32, i32
  }
  func.func @transform_5(%arg0: i32, %arg1: i32, %arg2: i32) -> (i32, i32) {
    %c0_i32 = arith.constant 0 : i32
    %c0_i32_0 = arith.constant 0 : i32
    %c0_i32_1 = arith.constant 0 : i32
    return %c0_i32, %c0_i32_0 : i32, i32
  }
  func.func @transform_6(%arg0: i32, %arg1: i32, %arg2: i32) -> (i32, i32, i32) {
    %c0_i32 = arith.constant 0 : i32
    %c0_i32_0 = arith.constant 0 : i32
    return %arg0, %c0_i32, %arg1 : i32, i32, i32
  }
}

</mosaic_0001>

<llo_original>
// kernel: tpu_custom_call.1
$region0: #{tpu_custom_call.1}
  #allocation0 [shape = 'u32[]', space=smem, size = 0x4, offset = 0x4, fixed_abs, tag = 'smem constant byte address 0x4 - core index']
  #allocation1 [shape = 'u32[144,128]{1,0:T(1,128)}', space=vmem, size = 0x12000, scoped, tag = 'internal scratch']
  #allocation2 [shape = 'f32[32,8]{1,0:T(8,128)}', space=vmem, size = 0x4000, scoped, tag = 'scratch operand']
  %s0 = inlined_call_operand.hbm [shape: bf16[2,8,7,8], index: 0, kind: input, shape index: {}]
  %s1 = inlined_call_operand.hbm [shape: bf16[2,7,8], index: 1, kind: input, shape index: {}]
  %s2 = inlined_call_operand.hbm [shape: bf16[16,7], index: 2, kind: input, shape index: {}]
  %s3 = inlined_call_operand.hbm [shape: f32[16,1], index: 3, kind: input, shape index: {}]
  %s4 = inlined_call_operand.hbm [shape: bf16[32,16], index: 4, kind: input, shape index: {}]
  %s5 = inlined_call_operand.hbm [shape: f32[32,1], index: 5, kind: input, shape index: {}]
  %s6 = inlined_call_operand.hbm [shape: f32[2,32,8], index: 6, kind: output, shape index: {}]
  %s7 = sld [smem:[#allocation0]]
  $region89: #{tpu_custom_call.1} parent=0
    _
  %s9 = ssub.s32 1, %s7
  %s10 = scalar_select 0, %s9, %s7
  $region1: #{tpu_custom_call.1} parent=0
    #allocation3 [shape = 'u8[32768]{0}', space=vmem, size = 0x8000, scoped, tag = 'input window, operand 0']
    #allocation4 [shape = 's32[2]{0}', space=sflag, size = 0x8, scoped, tag = 'scoped memory for tpu_custom_call.1']
    #allocation5 [shape = 's32[2]{0}', space=sflag, size = 0x8, scoped, tag = 'scoped memory for tpu_custom_call.1']
    #allocation6 [shape = 'u8[4096]{0}', space=vmem, size = 0x1000, scoped, tag = 'input window, operand 1']
    #allocation7 [shape = 's32[2]{0}', space=sflag, size = 0x8, scoped, tag = 'scoped memory for tpu_custom_call.1']
    #allocation8 [shape = 'u8[4096]{0}', space=vmem, size = 0x1000, scoped, tag = 'input window, operand 2, single buffered']
    #allocation9 [shape = 'u8[8192]{0}', space=vmem, size = 0x2000, scoped, tag = 'input window, operand 3, single buffered']
    #allocation10 [shape = 's32[1]{0}', space=sflag, size = 0x4, scoped, tag = 'scoped memory for tpu_custom_call.1']
    #allocation11 [shape = 'u8[8192]{0}', space=vmem, size = 0x2000, scoped, tag = 'input window, operand 4, single buffered']
    #allocation12 [shape = 'u8[16384]{0}', space=vmem, size = 0x4000, scoped, tag = 'input window, operand 5, single buffered']
    #allocation13 [shape = 's32[1]{0}', space=sflag, size = 0x4, scoped, tag = 'scoped memory for tpu_custom_call.1']
    #allocation14 [shape = 'u8[32768]{0}', space=vmem, size = 0x8000, scoped, tag = 'output window, operand 0']
    %11 = vsyncpa [#allocation4], 0
    %s12 = scalar_lea.sflag [#allocation4], 1
    %13 = vsyncpa %s12, 0
    %14 = vsyncpa [#allocation7], 0
    %s15 = scalar_lea.sflag [#allocation7], 1
    %16 = vsyncpa %s15, 0
    %17 = vsyncpa [#allocation10], 0
    %18 = vsyncpa [#allocation13], 0
    %19 = vsyncpa [#allocation5], 0
    %s20 = scalar_lea.sflag [#allocation5], 1
    %21 = vsyncpa %s20, 0
    loop: start=0, step=1, limit=4
    $region2: #{tpu_custom_call.1} parent=1 // loop_pre_header
      _
    $region3: #{tpu_custom_call.1} parent=1 // loop_header
      %s23 = sphi 0, %s27
      %p24 = scmp.ge.s32.totalorder %s23, 4
      %s30 = sphi 0, %s49
      %s31 = sphi 0, %s45
      %s32 = sphi 0, %s41
      %s33 = sphi 0, %s30
      %s34 = sphi 0, %s31
      %s35 = sphi 0, %s32
      %s36 = sphi 0, %s33
      %s37 = sphi 0, %s34
      %s38 = sphi 0, %s35
      %s56 = sphi 0, %s58
      %s59 = sphi 0, %s56
      %s60 = sphi 0, %s59
      %s76 = sphi 0, %s60
      %s84 = sphi 0, %s86
      %s87 = sphi 0, %s84
      %s88 = sphi 0, %s87
      %s104 = sphi 0, %s88
      %s108 = sphi 0, %s108
      %s110 = sphi 0, %s108
      %s111 = sphi 0, %s110
      %s125 = sphi 0, %s111
      %s129 = sphi 0, %s129
      %s131 = sphi 0, %s129
      %s132 = sphi 0, %s131
      %s146 = sphi 0, %s132
      %s150 = sphi 0, %s150
      %s152 = sphi 0, %s150
      %s153 = sphi 0, %s152
      %s167 = sphi 0, %s153
      %s171 = sphi 0, %s171
      %s173 = sphi 0, %s171
      %s174 = sphi 0, %s173
      %s188 = sphi 0, %s174
      %s196 = sphi 0, %s198
      %s199 = sphi 0, %s196
      %s200 = sphi 0, %s199
      %s216 = sphi 0, %s200
    $region4: #{tpu_custom_call.1} parent=1 // loop_header_branch
      %26 = sbr.rel (%p24) target = $region8
    $region5: #{tpu_custom_call.1} parent=1 // loop_body
      %s28 = ssub.s32 %s23, 1
      %s29 = ssub.s32 %s23, 2
      %s39 = sadd.s32 1, %s32
      %p40 = scmp.ge.s32.totalorder %s39, 1
      %s41 = scalar_select %p40, 0, %s39
      %s42 = sadd.s32 1, %s31
      %s43 = scalar_select %p40, %s42, %s31
      %p44 = scmp.ge.s32.totalorder %s43, 1
      %s45 = scalar_select %p44, 0, %s43
      %s46 = sadd.s32 1, %s30
      %s47 = scalar_select %p44, %s46, %s30
      %p48 = scmp.ge.s32.totalorder %s47, 2
      %s49 = scalar_select %p48, 0, %s47
      %s50 = ssub.s32 %s30, %s49
      %s51 = ssub.s32 %s32, %s41
      %s52 = sor.u32 %s50, %s51
      %s53 = ssub.s32 %s31, %s45
      %s54 = sor.u32 %s52, %s53
      %p55 = scmp.eq.s32.totalorder %s54, 0
      %s57 = sadd.s32 %s56, 1
      %s58 = scalar_select %p55, %s56, %s57
      %p61 = pneg %p55
      %p62 = scmp.eq.s32.totalorder %s23, 1
      %p63 = por %p61, %p62
      %p64 = scmp.ne.s32.totalorder %s56, %s59
      %p65 = scmp.eq.s32.totalorder %s23, 0
      %p66 = por %p64, %p65
      %p67 = scmp.ne.s32.totalorder %s56, %s59
      %p68 = scmp.eq.s32.totalorder %s28, 1
      %p69 = por %p67, %p68
      %p70 = scmp.ne.s32.totalorder %s59, %s60
      %p71 = scmp.eq.s32.totalorder %s28, 0
      %p72 = por %p70, %p71
      %p73 = scmp.ne.s32.totalorder %s59, %s60
      %p74 = scmp.eq.s32.totalorder %s29, 1
      %p75 = por %p73, %p74
      %p77 = scmp.ne.s32.totalorder %s60, %s76
      %p78 = scmp.eq.s32.totalorder %s29, 0
      %p79 = por %p77, %p78
      %s80 = ssub.s32 %s30, %s49
      %s81 = ssub.s32 %s31, %s45
      %s82 = sor.u32 %s80, %s81
      %p83 = scmp.eq.s32.totalorder %s82, 0
      %s85 = sadd.s32 %s84, 1
      %s86 = scalar_select %p83, %s84, %s85
      %p89 = pneg %p83
      %p90 = scmp.eq.s32.totalorder %s23, 1
      %p91 = por %p89, %p90
      %p92 = scmp.ne.s32.totalorder %s84, %s87
      %p93 = scmp.eq.s32.totalorder %s23, 0
      %p94 = por %p92, %p93
      %p95 = scmp.ne.s32.totalorder %s84, %s87
      %p96 = scmp.eq.s32.totalorder %s28, 1
      %p97 = por %p95, %p96
      %p98 = scmp.ne.s32.totalorder %s87, %s88
      %p99 = scmp.eq.s32.totalorder %s28, 0
      %p100 = por %p98, %p99
      %p101 = scmp.ne.s32.totalorder %s87, %s88
      %p102 = scmp.eq.s32.totalorder %s29, 1
      %p103 = por %p101, %p102
      %p105 = scmp.ne.s32.totalorder %s88, %s104
      %p106 = scmp.eq.s32.totalorder %s29, 0
      %p107 = por %p105, %p106
      %s109 = sadd.s32 %s108, 1
      %p112 = scmp.eq.s32.totalorder %s23, 1
      %p113 = scmp.ne.s32.totalorder %s108, %s110
      %p114 = scmp.eq.s32.totalorder %s23, 0
      %p115 = por %p113, %p114
      %p116 = scmp.ne.s32.totalorder %s108, %s110
      %p117 = scmp.eq.s32.totalorder %s28, 1
      %p118 = por %p116, %p117
      %p119 = scmp.ne.s32.totalorder %s110, %s111
      %p120 = scmp.eq.s32.totalorder %s28, 0
      %p121 = por %p119, %p120
      %p122 = scmp.ne.s32.totalorder %s110, %s111
      %p123 = scmp.eq.s32.totalorder %s29, 1
      %p124 = por %p122, %p123
      %p126 = scmp.ne.s32.totalorder %s111, %s125
      %p127 = scmp.eq.s32.totalorder %s29, 0
      %p128 = por %p126, %p127
      %s130 = sadd.s32 %s129, 1
      %p133 = scmp.eq.s32.totalorder %s23, 1
      %p134 = scmp.ne.s32.totalorder %s129, %s131
      %p135 = scmp.eq.s32.totalorder %s23, 0
      %p136 = por %p134, %p135
      %p137 = scmp.ne.s32.totalorder %s129, %s131
      %p138 = scmp.eq.s32.totalorder %s28, 1
      %p139 = por %p137, %p138
      %p140 = scmp.ne.s32.totalorder %s131, %s132
      %p141 = scmp.eq.s32.totalorder %s28, 0
      %p142 = por %p140, %p141
      %p143 = scmp.ne.s32.totalorder %s131, %s132
      %p144 = scmp.eq.s32.totalorder %s29, 1
      %p145 = por %p143, %p144
      %p147 = scmp.ne.s32.totalorder %s132, %s146
      %p148 = scmp.eq.s32.totalorder %s29, 0
      %p149 = por %p147, %p148
      %s151 = sadd.s32 %s150, 1
      %p154 = scmp.eq.s32.totalorder %s23, 1
      %p155 = scmp.ne.s32.totalorder %s150, %s152
      %p156 = scmp.eq.s32.totalorder %s23, 0
      %p157 = por %p155, %p156
      %p158 = scmp.ne.s32.totalorder %s150, %s152
      %p159 = scmp.eq.s32.totalorder %s28, 1
      %p160 = por %p158, %p159
      %p161 = scmp.ne.s32.totalorder %s152, %s153
      %p162 = scmp.eq.s32.totalorder %s28, 0
      %p163 = por %p161, %p162
      %p164 = scmp.ne.s32.totalorder %s152, %s153
      %p165 = scmp.eq.s32.totalorder %s29, 1
      %p166 = por %p164, %p165
      %p168 = scmp.ne.s32.totalorder %s153, %s167
      %p169 = scmp.eq.s32.totalorder %s29, 0
      %p170 = por %p168, %p169
      %s172 = sadd.s32 %s171, 1
      %p175 = scmp.eq.s32.totalorder %s23, 1
      %p176 = scmp.ne.s32.totalorder %s171, %s173
      %p177 = scmp.eq.s32.totalorder %s23, 0
      %p178 = por %p176, %p177
      %p179 = scmp.ne.s32.totalorder %s171, %s173
      %p180 = scmp.eq.s32.totalorder %s28, 1
      %p181 = por %p179, %p180
      %p182 = scmp.ne.s32.totalorder %s173, %s174
      %p183 = scmp.eq.s32.totalorder %s28, 0
      %p184 = por %p182, %p183
      %p185 = scmp.ne.s32.totalorder %s173, %s174
      %p186 = scmp.eq.s32.totalorder %s29, 1
      %p187 = por %p185, %p186
      %p189 = scmp.ne.s32.totalorder %s174, %s188
      %p190 = scmp.eq.s32.totalorder %s29, 0
      %p191 = por %p189, %p190
      %s192 = ssub.s32 %s30, %s49
      %s193 = ssub.s32 %s31, %s45
      %s194 = sor.u32 %s192, %s193
      %p195 = scmp.eq.s32.totalorder %s194, 0
      %s197 = sadd.s32 %s196, 1
      %s198 = scalar_select %p195, %s196, %s197
      %p201 = pneg %p195
      %p202 = scmp.eq.s32.totalorder %s23, 1
      %p203 = por %p201, %p202
      %p204 = scmp.ne.s32.totalorder %s196, %s199
      %p205 = scmp.eq.s32.totalorder %s23, 0
      %p206 = por %p204, %p205
      %p207 = scmp.ne.s32.totalorder %s196, %s199
      %p208 = scmp.eq.s32.totalorder %s28, 1
      %p209 = por %p207, %p208
      %p210 = scmp.ne.s32.totalorder %s199, %s200
      %p211 = scmp.eq.s32.totalorder %s28, 0
      %p212 = por %p210, %p211
      %p213 = scmp.ne.s32.totalorder %s199, %s200
      %p214 = scmp.eq.s32.totalorder %s29, 1
      %p215 = por %p213, %p214
      %p217 = scmp.ne.s32.totalorder %s200, %s216
      %p218 = scmp.eq.s32.totalorder %s29, 0
      %p219 = por %p217, %p218
      %p220 = scmp.le.s32.totalorder 1, %s23
      %p221 = scmp.lt.s32.totalorder %s23, 3
      %p222 = pnand %p220, %p221
      %p223 = pneg %p222
      // Predicated region
      $region9: #{tpu_custom_call.1} parent=5 // pred_check
        _
      $region10: #{tpu_custom_call.1} parent=5 // pred_check_branch
        %225 = sbr.rel (%p222) target = $region12
      $region11: #{tpu_custom_call.1} parent=5 // pred_region
        %s226 = ssub.s32 %s23, 1
        // Predicated region
        $region13: #{tpu_custom_call.1} parent=11 // pred_check
          %p227 = pneg %p121
        $region14: #{tpu_custom_call.1} parent=11 // pred_check_branch
          %229 = sbr.rel (%p227) target = $region16
        $region15: #{tpu_custom_call.1} parent=11 // pred_region
          %s231 = ssub.s32 128, 128
          %232 = vsyncadd [#allocation7], %s231
          %s233 = sshll.u32 [#allocation8], 4
          %s234 = int_to_ptr.vmem [resolvable:$true] %s233
          %239 = dma.hbm_to_vmem [thread:$0]  %s2, 128, %s234, [#allocation7], 64, 64, 4
        $region16: #{tpu_custom_call.1} parent=11 // pred_fallthru
          _
        // Predicated region
        $region17: #{tpu_custom_call.1} parent=11 // pred_check
          %p240 = pneg %p142
        $region18: #{tpu_custom_call.1} parent=11 // pred_check_branch
          %242 = sbr.rel (%p240) target = $region20
        $region19: #{tpu_custom_call.1} parent=11 // pred_region
          %s244 = ssub.s32 256, 256
          %245 = vsyncadd [#allocation10], %s244
          %s246 = sshll.u32 [#allocation9], 4
          %s247 = int_to_ptr.vmem [resolvable:$true] %s246
          %252 = dma.hbm_to_vmem [thread:$0]  %s3, 256, %s247, [#allocation10], 128, 128, 8
        $region20: #{tpu_custom_call.1} parent=11 // pred_fallthru
          _
        // Predicated region
        $region21: #{tpu_custom_call.1} parent=11 // pred_check
          %p253 = pneg %p163
        $region22: #{tpu_custom_call.1} parent=11 // pred_check_branch
          %255 = sbr.rel (%p253) target = $region24
        $region23: #{tpu_custom_call.1} parent=11 // pred_region
          %s257 = ssub.s32 256, 256
          %258 = vsyncadd [#allocation10], %s257
          %s259 = sshll.u32 [#allocation11], 4
          %s260 = int_to_ptr.vmem [resolvable:$true] %s259
          %265 = dma.hbm_to_vmem [thread:$0]  %s4, 256, %s260, [#allocation10], 64, 64, 4
        $region24: #{tpu_custom_call.1} parent=11 // pred_fallthru
          _
        // Predicated region
        $region25: #{tpu_custom_call.1} parent=11 // pred_check
          %p266 = pneg %p184
        $region26: #{tpu_custom_call.1} parent=11 // pred_check_branch
          %268 = sbr.rel (%p266) target = $region28
        $region27: #{tpu_custom_call.1} parent=11 // pred_region
          %s270 = ssub.s32 512, 512
          %271 = vsyncadd [#allocation13], %s270
          %s272 = sshll.u32 [#allocation12], 4
          %s273 = int_to_ptr.vmem [resolvable:$true] %s272
          %278 = dma.hbm_to_vmem [thread:$0]  %s5, 512, %s273, [#allocation13], 128, 128, 8
        $region28: #{tpu_custom_call.1} parent=11 // pred_fallthru
          _
      $region12: #{tpu_custom_call.1} parent=5 // pred_fallthru
        _
      %p279 = scmp.lt.s32.totalorder %s23, 2
      // Predicated region
      $region29: #{tpu_custom_call.1} parent=5 // pred_check
        %p280 = pneg %p279
      $region30: #{tpu_custom_call.1} parent=5 // pred_check_branch
        %282 = sbr.rel (%p280) target = $region32
      $region31: #{tpu_custom_call.1} parent=5 // pred_region
        // Predicated region
        $region33: #{tpu_custom_call.1} parent=31 // pred_check
          %p283 = pneg %p66
        $region34: #{tpu_custom_call.1} parent=31 // pred_check_branch
          %285 = sbr.rel (%p283) target = $region36
        $region35: #{tpu_custom_call.1} parent=31 // pred_region
          %s286 = sand.u32 %s56, 1
          %s287 = scalar_lea.sflag [#allocation4], %s286
          %s288 = sand.u32 %s56, 1
          %s289 = smul.addr %s288, 32
          %s290 = scalar_lea.vmem [#allocation3], %s289
          %s291 = smul.u32 8, %s32
          %s293 = ssub.s32 512, 512
          %294 = vsyncadd %s287, %s293
          %s295 = sadd.s32 %s31, %s291
          %s296 = smul.addr %s30, 8
          %s297 = sadd.s32 %s295, %s296
          %s298 = smul.addr %s297, 64
          %s299 = scalar_lea.hbm %s0, %s298
          %s300 = sshll.u32 %s290, 4
          %s301 = int_to_ptr.vmem [resolvable:$true] %s300
          %306 = dma.hbm_to_vmem [thread:$0]  %s299, 512, %s301, %s287, 64, 64, 4
        $region36: #{tpu_custom_call.1} parent=31 // pred_fallthru
          _
        // Predicated region
        $region37: #{tpu_custom_call.1} parent=31 // pred_check
          %p307 = pneg %p94
        $region38: #{tpu_custom_call.1} parent=31 // pred_check_branch
          %309 = sbr.rel (%p307) target = $region40
        $region39: #{tpu_custom_call.1} parent=31 // pred_region
          %s310 = sand.u32 %s23, 1
          %s311 = scalar_lea.sflag [#allocation7], %s310
          %s312 = sand.u32 %s84, 1
          %s313 = smul.addr %s312, 4
          %s314 = scalar_lea.vmem [#allocation6], %s313
          %s316 = ssub.s32 64, 64
          %317 = vsyncadd %s311, %s316
          %s318 = sadd.s32 %s31, %s30
          %s319 = smul.addr %s318, 64
          %s320 = scalar_lea.hbm %s1, %s319
          %s322 = sshll.u32 %s314, 4
          %s323 = int_to_ptr.vmem [resolvable:$true] %s322
          %325 = dma.hbm_to_vmem [thread:$0]  %s320, 64, %s323, %s311
        $region40: #{tpu_custom_call.1} parent=31 // pred_fallthru
          _
      $region32: #{tpu_custom_call.1} parent=5 // pred_fallthru
        _
      %p326 = scmp.le.s32.totalorder 1, %s23
      %p327 = scmp.lt.s32.totalorder %s23, 3
      %p328 = pnand %p326, %p327
      %p329 = pneg %p328
      // Predicated region
      $region41: #{tpu_custom_call.1} parent=5 // pred_check
        _
      $region42: #{tpu_custom_call.1} parent=5 // pred_check_branch
        %331 = sbr.rel (%p328) target = $region44
      $region43: #{tpu_custom_call.1} parent=5 // pred_region
        %s332 = ssub.s32 %s23, 1
        %s333 = sand.u32 %s59, 1
        %s334 = scalar_lea.sflag [#allocation4], %s333
        %s335 = sand.u32 %s59, 1
        %s336 = smul.addr %s335, 32
        %s337 = scalar_lea.vmem [#allocation3], %s336
        // Predicated region
        $region45: #{tpu_custom_call.1} parent=43 // pred_check
          %p338 = pneg %p72
        $region46: #{tpu_custom_call.1} parent=43 // pred_check_branch
          %340 = sbr.rel (%p338) target = $region48
        $region47: #{tpu_custom_call.1} parent=43 // pred_region
          %341 = dma.done %s334, 512
        $region48: #{tpu_custom_call.1} parent=43 // pred_fallthru
          _
        %s342 = sand.u32 %s28, 1
        %s343 = scalar_lea.sflag [#allocation7], %s342
        %s344 = sand.u32 %s87, 1
        %s345 = smul.addr %s344, 4
        %s346 = scalar_lea.vmem [#allocation6], %s345
        // Predicated region
        $region49: #{tpu_custom_call.1} parent=43 // pred_check
          %p347 = pneg %p100
        $region50: #{tpu_custom_call.1} parent=43 // pred_check_branch
          %349 = sbr.rel (%p347) target = $region52
        $region51: #{tpu_custom_call.1} parent=43 // pred_region
          %350 = dma.done %s343, 64
        $region52: #{tpu_custom_call.1} parent=43 // pred_fallthru
          _
        // Predicated region
        $region53: #{tpu_custom_call.1} parent=43 // pred_check
          %p351 = pneg %p121
        $region54: #{tpu_custom_call.1} parent=43 // pred_check_branch
          %353 = sbr.rel (%p351) target = $region56
        $region55: #{tpu_custom_call.1} parent=43 // pred_region
          %354 = dma.done [#allocation7], 128
        $region56: #{tpu_custom_call.1} parent=43 // pred_fallthru
          _
        // Predicated region
        $region57: #{tpu_custom_call.1} parent=43 // pred_check
          %p355 = pneg %p142
        $region58: #{tpu_custom_call.1} parent=43 // pred_check_branch
          %357 = sbr.rel (%p355) target = $region60
        $region59: #{tpu_custom_call.1} parent=43 // pred_region
          %358 = dma.done [#allocation10], 256
        $region60: #{tpu_custom_call.1} parent=43 // pred_fallthru
          _
        // Predicated region
        $region61: #{tpu_custom_call.1} parent=43 // pred_check
          %p359 = pneg %p163
        $region62: #{tpu_custom_call.1} parent=43 // pred_check_branch
          %361 = sbr.rel (%p359) target = $region64
        $region63: #{tpu_custom_call.1} parent=43 // pred_region
          %362 = dma.done [#allocation10], 256
        $region64: #{tpu_custom_call.1} parent=43 // pred_fallthru
          _
        // Predicated region
        $region65: #{tpu_custom_call.1} parent=43 // pred_check
          %p363 = pneg %p184
        $region66: #{tpu_custom_call.1} parent=43 // pred_check_branch
          %365 = sbr.rel (%p363) target = $region68
        $region67: #{tpu_custom_call.1} parent=43 // pred_region
          %366 = dma.done [#allocation13], 512
        $region68: #{tpu_custom_call.1} parent=43 // pred_fallthru
          _
        %s367 = sand.u32 %s59, 1
        %s368 = scalar_lea.sflag [#allocation4], %s367
        %s369 = sand.u32 %s59, 1
        %s370 = smul.addr %s369, 32
        %s371 = scalar_lea.vmem [#allocation3], %s370
        %p372 = pneg %p72
        %p373 = pneg %p69
        %s374 = sand.u32 %s28, 1
        %s375 = scalar_lea.sflag [#allocation7], %s374
        %s376 = sand.u32 %s87, 1
        %s377 = smul.addr %s376, 4
        %s378 = scalar_lea.vmem [#allocation6], %s377
        %p379 = pneg %p100
        %p380 = pneg %p97
        %p381 = pneg %p121
        %p382 = pneg %p118
        %p383 = pneg %p142
        %p384 = pneg %p139
        %p385 = pneg %p163
        %p386 = pneg %p160
        %p387 = pneg %p184
        %p388 = pneg %p181
        %p389 = pneg %p212
        %p390 = pneg %p209
        %s391 = sand.u32 %s199, 1
        %s392 = scalar_lea.sflag [#allocation5], %s391
        %s393 = sand.u32 %s199, 1
        %s394 = smul.addr %s393, 32
        %s395 = scalar_lea.vmem [#allocation14], %s394
        %s396 = smul.u32 8, %s35
        %p398 = scmp.eq.s32.totalorder %s35, 0
        // Predicated region
        $region69: #{tpu_custom_call.1} parent=43 // pred_check
          %p399 = pneg %p398
        $region70: #{tpu_custom_call.1} parent=43 // pred_check_branch
          %401 = sbr.rel (%p399) target = $region72
        $region71: #{tpu_custom_call.1} parent=43 // pred_region
          %vm402 = vcmask 64512
          %403 = vst.msk [vmem:[#allocation2] sm:$0xff] %vm402, -inf
          %404 = vst.msk [vmem:[#allocation2 + $0x8] sm:$0xff] %vm402, -inf
          %405 = vst.msk [vmem:[#allocation2 + $0x10] sm:$0xff] %vm402, -inf
          %406 = vst.msk [vmem:[#allocation2 + $0x18] sm:$0xff] %vm402, -inf
        $region72: #{tpu_custom_call.1} parent=43 // pred_fallthru
          _
        %v407 = vld [vmem:[%s346] sm:$0xf]
        %v408 = vld [vmem:[#allocation8] sm:$0xf]
        %v409 = vld [vmem:[#allocation8 + $0x4] sm:$0xf]
        %v410 = vld [vmem:[#allocation11] sm:$0xf]
        %v411 = vld [vmem:[#allocation11 + $0x4] sm:$0xf]
        %v412 = vld [vmem:[#allocation11 + $0x8] sm:$0xf]
        %v413 = vld [vmem:[#allocation11 + $0xc] sm:$0xf]
        %v414 = vld [vmem:[#allocation9] sm:$0xff]
        %v415 = vld [vmem:[#allocation9 + $0x8] sm:$0xff]
        %v416 = vld [vmem:[#allocation12] sm:$0xff]
        %v417 = vld [vmem:[#allocation12 + $0x8] sm:$0xff]
        %v418 = vld [vmem:[#allocation12 + $0x10] sm:$0xff]
        %v419 = vld [vmem:[#allocation12 + $0x18] sm:$0xff]
        %v420 = vld [vmem:[%s337] sm:$0xf]
        %v421 = vsub.bf16 %v420, %v407
        %423 = vset.pattern.permute.xlu0 0
        %424 = vperm.xlu0 %423, %v414
        %v425 = vpop.permute.xlu0 %424
        %428 = vset.pattern.permute.xlu0 0
        %429 = vperm.xlu0 %428, %v415
        %v430 = vpop.permute.xlu0 %429
        %v434 = vunpack.c.l.b16 %v408
        %v435 = vunpack.c.l.b16 %v409
        %v436 = vpack.c.b16 %v435, %v434
        %vm437 = vcmask 56320
        %v439 = vsel %vm437, %v436, 0
        %vm441 = vcmask 1042432
        %vm442 = vcmask 1043456
        %v443 = vsel %vm441, 4294967295, 65535
        %v444 = vsel %vm442, %v443, 0
        %v446 = vand.u32 %v421, %v444
        %448 = vmatprep.subr.bf16.mxu0 0
        %449 = vmatpush1.bf16.msra.mxu0 %v446
        %450 = vmatprep.subr.bf16.mxu0 0
        %451 = vmatpush1.bf16.msra.mxu0 0
        %452 = vmatprep.subr.bf16.mxu0 0
        %453 = vmatpush1.bf16.msra.mxu0 0
        %454 = vmatprep.subr.bf16.mxu0 0
        %455 = vmatpush1.bf16.msra.mxu0 0
        %456 = vmatprep.subr.bf16.mxu0 0
        %457 = vmatpush1.bf16.msra.mxu0 0
        %458 = vmatprep.subr.bf16.mxu0 0
        %459 = vmatpush1.bf16.msra.mxu0 0
        %460 = vmatprep.subr.bf16.mxu0 0
        %461 = vmatpush1.bf16.msra.mxu0 0
        %462 = vmatprep.subr.bf16.mxu0 0
        %463 = vmatpush1.bf16.msra.mxu0 0
        %464 = vmatprep.subr.bf16.mxu0 0
        %465 = vmatpush1.bf16.msra.mxu0 0
        %466 = vmatprep.subr.bf16.mxu0 0
        %467 = vmatpush1.bf16.msra.mxu0 0
        %468 = vmatprep.subr.bf16.mxu0 0
        %469 = vmatpush1.bf16.msra.mxu0 0
        %470 = vmatprep.subr.bf16.mxu0 0
        %471 = vmatpush1.bf16.msra.mxu0 0
        %472 = vmatprep.subr.bf16.mxu0 0
        %473 = vmatpush1.bf16.msra.mxu0 0
        %474 = vmatprep.subr.bf16.mxu0 0
        %475 = vmatpush1.bf16.msra.mxu0 0
        %476 = vmatprep.subr.bf16.mxu0 0
        %477 = vmatpush1.bf16.msra.mxu0 0
        %478 = vmatprep.subr.bf16.mxu0 0
        %479 = vmatpush1.bf16.msra.mxu0 0
        %480 = vmatprep.mubr.bf16.mxu0 0
        %481 = vmatmul.mubr.bf16.gmra.mrb[0].mxu0 %v439
        %v482 = vpop.f32.mrb[0].mxu0
        %v483 = vadd.f32 %v425, %v482
        %v484 = vpop.f32.mrb[0].mxu0
        %v485 = vpop.f32.mrb[0].mxu0
        %v486 = vadd.f32 %v430, %v485
        %v487 = vpop.f32.mrb[0].mxu0
        %488 = vdwg.mxu0
        %v489 = vmax.f32 %v483, 0.0
        %v490 = vmax.f32 %v486, 0.0
        %v491 = vpack.c.bf16 %v490, %v489
        %493 = vset.pattern.permute.xlu0 0
        %494 = vperm.xlu0 %493, %v416
        %v495 = vpop.permute.xlu0 %494
        %498 = vset.pattern.permute.xlu0 0
        %499 = vperm.xlu0 %498, %v417
        %v500 = vpop.permute.xlu0 %499
        %503 = vset.pattern.permute.xlu0 0
        %504 = vperm.xlu0 %503, %v418
        %v505 = vpop.permute.xlu0 %504
        %508 = vset.pattern.permute.xlu0 0
        %509 = vperm.xlu0 %508, %v419
        %v510 = vpop.permute.xlu0 %509
        %v516 = vunpack.c.l.b16 %v410
        %v517 = vunpack.c.l.b16 %v411
        %v518 = vunpack.c.l.b16 %v412
        %v519 = vunpack.c.l.b16 %v413
        %v520 = vpack.c.b16 %v517, %v516
        %v521 = vpack.c.b16 %v519, %v518
        %vm522 = vcmask 130048
        %v524 = vsel %vm522, %v520, 0
        %v527 = vsel %vm522, %v521, 0
        %529 = vmatprep.subr.bf16.mxu0 0
        %530 = vmatpush1.bf16.msra.mxu0 %v491
        %531 = vmatprep.subr.bf16.mxu0 0
        %532 = vmatpush1.bf16.msra.mxu0 0
        %533 = vmatprep.subr.bf16.mxu0 0
        %534 = vmatpush1.bf16.msra.mxu0 0
        %535 = vmatprep.subr.bf16.mxu0 0
        %536 = vmatpush1.bf16.msra.mxu0 0
        %537 = vmatprep.subr.bf16.mxu0 0
        %538 = vmatpush1.bf16.msra.mxu0 0
        %539 = vmatprep.subr.bf16.mxu0 0
        %540 = vmatpush1.bf16.msra.mxu0 0
        %541 = vmatprep.subr.bf16.mxu0 0
        %542 = vmatpush1.bf16.msra.mxu0 0
        %543 = vmatprep.subr.bf16.mxu0 0
        %544 = vmatpush1.bf16.msra.mxu0 0
        %545 = vmatprep.subr.bf16.mxu0 0
        %546 = vmatpush1.bf16.msra.mxu0 0
        %547 = vmatprep.subr.bf16.mxu0 0
        %548 = vmatpush1.bf16.msra.mxu0 0
        %549 = vmatprep.subr.bf16.mxu0 0
        %550 = vmatpush1.bf16.msra.mxu0 0
        %551 = vmatprep.subr.bf16.mxu0 0
        %552 = vmatpush1.bf16.msra.mxu0 0
        %553 = vmatprep.subr.bf16.mxu0 0
        %554 = vmatpush1.bf16.msra.mxu0 0
        %555 = vmatprep.subr.bf16.mxu0 0
        %556 = vmatpush1.bf16.msra.mxu0 0
        %557 = vmatprep.subr.bf16.mxu0 0
        %558 = vmatpush1.bf16.msra.mxu0 0
        %559 = vmatprep.subr.bf16.mxu0 0
        %560 = vmatpush1.bf16.msra.mxu0 0
        %561 = vmatprep.mubr.bf16.mxu0 0
        %562 = vmatmul.mubr.bf16.gmra.mrb[0].mxu0 %v524
        %v563 = vpop.f32.mrb[0].mxu0
        %v564 = vadd.f32 %v495, %v563
        %v565 = vpop.f32.mrb[0].mxu0
        %v566 = vpop.f32.mrb[0].mxu0
        %v567 = vadd.f32 %v500, %v566
        %v568 = vpop.f32.mrb[0].mxu0
        %569 = vmatprep.mubr.bf16.mxu0 0
        %570 = vmatmul.mubr.bf16.gmra.mrb[0].mxu0 %v527
        %v571 = vpop.f32.mrb[0].mxu0
        %v572 = vadd.f32 %v505, %v571
        %v573 = vpop.f32.mrb[0].mxu0
        %v574 = vpop.f32.mrb[0].mxu0
        %v575 = vadd.f32 %v510, %v574
        %v576 = vpop.f32.mrb[0].mxu0
        %577 = vdwg.mxu0
        %v578 = vmax.f32 %v564, 0.0
        %v579 = vmax.f32 %v567, 0.0
        %v580 = vmax.f32 %v572, 0.0
        %v581 = vmax.f32 %v575, 0.0
        %s582 = scalar_lea.vmem %s337, 4 [#allocation3]
        %v583 = vld [vmem:[%s582] sm:$0xf]
        %v584 = vsub.bf16 %v583, %v407
        %v586 = vand.u32 %v584, %v444
        %588 = vmatprep.subr.bf16.mxu0 0
        %589 = vmatpush1.bf16.msra.mxu0 %v586
        %590 = vmatprep.subr.bf16.mxu0 0
        %591 = vmatpush1.bf16.msra.mxu0 0
        %592 = vmatprep.subr.bf16.mxu0 0
        %593 = vmatpush1.bf16.msra.mxu0 0
        %594 = vmatprep.subr.bf16.mxu0 0
        %595 = vmatpush1.bf16.msra.mxu0 0
        %596 = vmatprep.subr.bf16.mxu0 0
        %597 = vmatpush1.bf16.msra.mxu0 0
        %598 = vmatprep.subr.bf16.mxu0 0
        %599 = vmatpush1.bf16.msra.mxu0 0
        %600 = vmatprep.subr.bf16.mxu0 0
        %601 = vmatpush1.bf16.msra.mxu0 0
        %602 = vmatprep.subr.bf16.mxu0 0
        %603 = vmatpush1.bf16.msra.mxu0 0
        %604 = vmatprep.subr.bf16.mxu0 0
        %605 = vmatpush1.bf16.msra.mxu0 0
        %606 = vmatprep.subr.bf16.mxu0 0
        %607 = vmatpush1.bf16.msra.mxu0 0
        %608 = vmatprep.subr.bf16.mxu0 0
        %609 = vmatpush1.bf16.msra.mxu0 0
        %610 = vmatprep.subr.bf16.mxu0 0
        %611 = vmatpush1.bf16.msra.mxu0 0
        %612 = vmatprep.subr.bf16.mxu0 0
        %613 = vmatpush1.bf16.msra.mxu0 0
        %614 = vmatprep.subr.bf16.mxu0 0
        %615 = vmatpush1.bf16.msra.mxu0 0
        %616 = vmatprep.subr.bf16.mxu0 0
        %617 = vmatpush1.bf16.msra.mxu0 0
        %618 = vmatprep.subr.bf16.mxu0 0
        %619 = vmatpush1.bf16.msra.mxu0 0
        %620 = vmatprep.mubr.bf16.mxu0 0
        %621 = vmatmul.mubr.bf16.gmra.mrb[0].mxu0 %v439
        %v622 = vpop.f32.mrb[0].mxu0
        %v623 = vadd.f32 %v425, %v622
        %v624 = vpop.f32.mrb[0].mxu0
        %v625 = vpop.f32.mrb[0].mxu0
        %v626 = vadd.f32 %v430, %v625
        %v627 = vpop.f32.mrb[0].mxu0
        %628 = vdwg.mxu0
        %v629 = vmax.f32 %v623, 0.0
        %v630 = vmax.f32 %v626, 0.0
        %v631 = vpack.c.bf16 %v630, %v629
        %632 = vmatprep.subr.bf16.mxu0 0
        %633 = vmatpush1.bf16.msra.mxu0 %v631
        %634 = vmatprep.subr.bf16.mxu0 0
        %635 = vmatpush1.bf16.msra.mxu0 0
        %636 = vmatprep.subr.bf16.mxu0 0
        %637 = vmatpush1.bf16.msra.mxu0 0
        %638 = vmatprep.subr.bf16.mxu0 0
        %639 = vmatpush1.bf16.msra.mxu0 0
        %640 = vmatprep.subr.bf16.mxu0 0
        %641 = vmatpush1.bf16.msra.mxu0 0
        %642 = vmatprep.subr.bf16.mxu0 0
        %643 = vmatpush1.bf16.msra.mxu0 0
        %644 = vmatprep.subr.bf16.mxu0 0
        %645 = vmatpush1.bf16.msra.mxu0 0
        %646 = vmatprep.subr.bf16.mxu0 0
        %647 = vmatpush1.bf16.msra.mxu0 0
        %648 = vmatprep.subr.bf16.mxu0 0
        %649 = vmatpush1.bf16.msra.mxu0 0
        %650 = vmatprep.subr.bf16.mxu0 0
        %651 = vmatpush1.bf16.msra.mxu0 0
        %652 = vmatprep.subr.bf16.mxu0 0
        %653 = vmatpush1.bf16.msra.mxu0 0
        %654 = vmatprep.subr.bf16.mxu0 0
        %655 = vmatpush1.bf16.msra.mxu0 0
        %656 = vmatprep.subr.bf16.mxu0 0
        %657 = vmatpush1.bf16.msra.mxu0 0
        %658 = vmatprep.subr.bf16.mxu0 0
        %659 = vmatpush1.bf16.msra.mxu0 0
        %660 = vmatprep.subr.bf16.mxu0 0
        %661 = vmatpush1.bf16.msra.mxu0 0
        %662 = vmatprep.subr.bf16.mxu0 0
        %663 = vmatpush1.bf16.msra.mxu0 0
        %664 = vmatprep.mubr.bf16.mxu0 0
        %665 = vmatmul.mubr.bf16.gmra.mrb[0].mxu0 %v524
        %v666 = vpop.f32.mrb[0].mxu0
        %v667 = vadd.f32 %v495, %v666
        %v668 = vpop.f32.mrb[0].mxu0
        %v669 = vpop.f32.mrb[0].mxu0
        %v670 = vadd.f32 %v500, %v669
        %v671 = vpop.f32.mrb[0].mxu0
        %672 = vmatprep.mubr.bf16.mxu0 0
        %673 = vmatmul.mubr.bf16.gmra.mrb[0].mxu0 %v527
        %v674 = vpop.f32.mrb[0].mxu0
        %v675 = vadd.f32 %v505, %v674
        %v676 = vpop.f32.mrb[0].mxu0
        %v677 = vpop.f32.mrb[0].mxu0
        %v678 = vadd.f32 %v510, %v677
        %v679 = vpop.f32.mrb[0].mxu0
        %680 = vdwg.mxu0
        %v681 = vmax.f32 %v667, 0.0
        %v682 = vmax.f32 %v670, 0.0
        %v683 = vmax.f32 %v675, 0.0
        %v684 = vmax.f32 %v678, 0.0
        %v685 = vmax.f32 %v578, %v681
        %v686 = vmax.f32 %v579, %v682
        %v687 = vmax.f32 %v580, %v683
        %v688 = vmax.f32 %v581, %v684
        %s689 = scalar_lea.vmem %s337, 8 [#allocation3]
        %v690 = vld [vmem:[%s689] sm:$0xf]
        %v691 = vsub.bf16 %v690, %v407
        %v693 = vand.u32 %v691, %v444
        %695 = vmatprep.subr.bf16.mxu0 0
        %696 = vmatpush1.bf16.msra.mxu0 %v693
        %697 = vmatprep.subr.bf16.mxu0 0
        %698 = vmatpush1.bf16.msra.mxu0 0
        %699 = vmatprep.subr.bf16.mxu0 0
        %700 = vmatpush1.bf16.msra.mxu0 0
        %701 = vmatprep.subr.bf16.mxu0 0
        %702 = vmatpush1.bf16.msra.mxu0 0
        %703 = vmatprep.subr.bf16.mxu0 0
        %704 = vmatpush1.bf16.msra.mxu0 0
        %705 = vmatprep.subr.bf16.mxu0 0
        %706 = vmatpush1.bf16.msra.mxu0 0
        %707 = vmatprep.subr.bf16.mxu0 0
        %708 = vmatpush1.bf16.msra.mxu0 0
        %709 = vmatprep.subr.bf16.mxu0 0
        %710 = vmatpush1.bf16.msra.mxu0 0
        %711 = vmatprep.subr.bf16.mxu0 0
        %712 = vmatpush1.bf16.msra.mxu0 0
        %713 = vmatprep.subr.bf16.mxu0 0
        %714 = vmatpush1.bf16.msra.mxu0 0
        %715 = vmatprep.subr.bf16.mxu0 0
        %716 = vmatpush1.bf16.msra.mxu0 0
        %717 = vmatprep.subr.bf16.mxu0 0
        %718 = vmatpush1.bf16.msra.mxu0 0
        %719 = vmatprep.subr.bf16.mxu0 0
        %720 = vmatpush1.bf16.msra.mxu0 0
        %721 = vmatprep.subr.bf16.mxu0 0
        %722 = vmatpush1.bf16.msra.mxu0 0
        %723 = vmatprep.subr.bf16.mxu0 0
        %724 = vmatpush1.bf16.msra.mxu0 0
        %725 = vmatprep.subr.bf16.mxu0 0
        %726 = vmatpush1.bf16.msra.mxu0 0
        %727 = vmatprep.mubr.bf16.mxu0 0
        %728 = vmatmul.mubr.bf16.gmra.mrb[0].mxu0 %v439
        %v729 = vpop.f32.mrb[0].mxu0
        %v730 = vadd.f32 %v425, %v729
        %v731 = vpop.f32.mrb[0].mxu0
        %v732 = vpop.f32.mrb[0].mxu0
        %v733 = vadd.f32 %v430, %v732
        %v734 = vpop.f32.mrb[0].mxu0
        %735 = vdwg.mxu0
        %v736 = vmax.f32 %v730, 0.0
        %v737 = vmax.f32 %v733, 0.0
        %v738 = vpack.c.bf16 %v737, %v736
        %739 = vmatprep.subr.bf16.mxu0 0
        %740 = vmatpush1.bf16.msra.mxu0 %v738
        %741 = vmatprep.subr.bf16.mxu0 0
        %742 = vmatpush1.bf16.msra.mxu0 0
        %743 = vmatprep.subr.bf16.mxu0 0
        %744 = vmatpush1.bf16.msra.mxu0 0
        %745 = vmatprep.subr.bf16.mxu0 0
        %746 = vmatpush1.bf16.msra.mxu0 0
        %747 = vmatprep.subr.bf16.mxu0 0
        %748 = vmatpush1.bf16.msra.mxu0 0
        %749 = vmatprep.subr.bf16.mxu0 0
        %750 = vmatpush1.bf16.msra.mxu0 0
        %751 = vmatprep.subr.bf16.mxu0 0
        %752 = vmatpush1.bf16.msra.mxu0 0
        %753 = vmatprep.subr.bf16.mxu0 0
        %754 = vmatpush1.bf16.msra.mxu0 0
        %755 = vmatprep.subr.bf16.mxu0 0
        %756 = vmatpush1.bf16.msra.mxu0 0
        %757 = vmatprep.subr.bf16.mxu0 0
        %758 = vmatpush1.bf16.msra.mxu0 0
        %759 = vmatprep.subr.bf16.mxu0 0
        %760 = vmatpush1.bf16.msra.mxu0 0
        %761 = vmatprep.subr.bf16.mxu0 0
        %762 = vmatpush1.bf16.msra.mxu0 0
        %763 = vmatprep.subr.bf16.mxu0 0
        %764 = vmatpush1.bf16.msra.mxu0 0
        %765 = vmatprep.subr.bf16.mxu0 0
        %766 = vmatpush1.bf16.msra.mxu0 0
        %767 = vmatprep.subr.bf16.mxu0 0
        %768 = vmatpush1.bf16.msra.mxu0 0
        %769 = vmatprep.subr.bf16.mxu0 0
        %770 = vmatpush1.bf16.msra.mxu0 0
        %771 = vmatprep.mubr.bf16.mxu0 0
        %772 = vmatmul.mubr.bf16.gmra.mrb[0].mxu0 %v524
        %v773 = vpop.f32.mrb[0].mxu0
        %v774 = vadd.f32 %v495, %v773
        %v775 = vpop.f32.mrb[0].mxu0
        %v776 = vpop.f32.mrb[0].mxu0
        %v777 = vadd.f32 %v500, %v776
        %v778 = vpop.f32.mrb[0].mxu0
        %779 = vmatprep.mubr.bf16.mxu0 0
        %780 = vmatmul.mubr.bf16.gmra.mrb[0].mxu0 %v527
        %v781 = vpop.f32.mrb[0].mxu0
        %v782 = vadd.f32 %v505, %v781
        %v783 = vpop.f32.mrb[0].mxu0
        %v784 = vpop.f32.mrb[0].mxu0
        %v785 = vadd.f32 %v510, %v784
        %v786 = vpop.f32.mrb[0].mxu0
        %787 = vdwg.mxu0
        %v788 = vmax.f32 %v774, 0.0
        %v789 = vmax.f32 %v777, 0.0
        %v790 = vmax.f32 %v782, 0.0
        %v791 = vmax.f32 %v785, 0.0
        %v792 = vmax.f32 %v685, %v788
        %v793 = vmax.f32 %v686, %v789
        %v794 = vmax.f32 %v687, %v790
        %v795 = vmax.f32 %v688, %v791
        %s796 = scalar_lea.vmem %s337, 12 [#allocation3]
        %v797 = vld [vmem:[%s796] sm:$0xf]
        %v798 = vsub.bf16 %v797, %v407
        %v800 = vand.u32 %v798, %v444
        %802 = vmatprep.subr.bf16.mxu0 0
        %803 = vmatpush1.bf16.msra.mxu0 %v800
        %804 = vmatprep.subr.bf16.mxu0 0
        %805 = vmatpush1.bf16.msra.mxu0 0
        %806 = vmatprep.subr.bf16.mxu0 0
        %807 = vmatpush1.bf16.msra.mxu0 0
        %808 = vmatprep.subr.bf16.mxu0 0
        %809 = vmatpush1.bf16.msra.mxu0 0
        %810 = vmatprep.subr.bf16.mxu0 0
        %811 = vmatpush1.bf16.msra.mxu0 0
        %812 = vmatprep.subr.bf16.mxu0 0
        %813 = vmatpush1.bf16.msra.mxu0 0
        %814 = vmatprep.subr.bf16.mxu0 0
        %815 = vmatpush1.bf16.msra.mxu0 0
        %816 = vmatprep.subr.bf16.mxu0 0
        %817 = vmatpush1.bf16.msra.mxu0 0
        %818 = vmatprep.subr.bf16.mxu0 0
        %819 = vmatpush1.bf16.msra.mxu0 0
        %820 = vmatprep.subr.bf16.mxu0 0
        %821 = vmatpush1.bf16.msra.mxu0 0
        %822 = vmatprep.subr.bf16.mxu0 0
        %823 = vmatpush1.bf16.msra.mxu0 0
        %824 = vmatprep.subr.bf16.mxu0 0
        %825 = vmatpush1.bf16.msra.mxu0 0
        %826 = vmatprep.subr.bf16.mxu0 0
        %827 = vmatpush1.bf16.msra.mxu0 0
        %828 = vmatprep.subr.bf16.mxu0 0
        %829 = vmatpush1.bf16.msra.mxu0 0
        %830 = vmatprep.subr.bf16.mxu0 0
        %831 = vmatpush1.bf16.msra.mxu0 0
        %832 = vmatprep.subr.bf16.mxu0 0
        %833 = vmatpush1.bf16.msra.mxu0 0
        %834 = vmatprep.mubr.bf16.mxu0 0
        %835 = vmatmul.mubr.bf16.gmra.mrb[0].mxu0 %v439
        %v836 = vpop.f32.mrb[0].mxu0
        %v837 = vadd.f32 %v425, %v836
        %v838 = vpop.f32.mrb[0].mxu0
        %v839 = vpop.f32.mrb[0].mxu0
        %v840 = vadd.f32 %v430, %v839
        %v841 = vpop.f32.mrb[0].mxu0
        %842 = vdwg.mxu0
        %v843 = vmax.f32 %v837, 0.0
        %v844 = vmax.f32 %v840, 0.0
        %v845 = vpack.c.bf16 %v844, %v843
        %846 = vmatprep.subr.bf16.mxu0 0
        %847 = vmatpush1.bf16.msra.mxu0 %v845
        %848 = vmatprep.subr.bf16.mxu0 0
        %849 = vmatpush1.bf16.msra.mxu0 0
        %850 = vmatprep.subr.bf16.mxu0 0
        %851 = vmatpush1.bf16.msra.mxu0 0
        %852 = vmatprep.subr.bf16.mxu0 0
        %853 = vmatpush1.bf16.msra.mxu0 0
        %854 = vmatprep.subr.bf16.mxu0 0
        %855 = vmatpush1.bf16.msra.mxu0 0
        %856 = vmatprep.subr.bf16.mxu0 0
        %857 = vmatpush1.bf16.msra.mxu0 0
        %858 = vmatprep.subr.bf16.mxu0 0
        %859 = vmatpush1.bf16.msra.mxu0 0
        %860 = vmatprep.subr.bf16.mxu0 0
        %861 = vmatpush1.bf16.msra.mxu0 0
        %862 = vmatprep.subr.bf16.mxu0 0
        %863 = vmatpush1.bf16.msra.mxu0 0
        %864 = vmatprep.subr.bf16.mxu0 0
        %865 = vmatpush1.bf16.msra.mxu0 0
        %866 = vmatprep.subr.bf16.mxu0 0
        %867 = vmatpush1.bf16.msra.mxu0 0
        %868 = vmatprep.subr.bf16.mxu0 0
        %869 = vmatpush1.bf16.msra.mxu0 0
        %870 = vmatprep.subr.bf16.mxu0 0
        %871 = vmatpush1.bf16.msra.mxu0 0
        %872 = vmatprep.subr.bf16.mxu0 0
        %873 = vmatpush1.bf16.msra.mxu0 0
        %874 = vmatprep.subr.bf16.mxu0 0
        %875 = vmatpush1.bf16.msra.mxu0 0
        %876 = vmatprep.subr.bf16.mxu0 0
        %877 = vmatpush1.bf16.msra.mxu0 0
        %878 = vmatprep.mubr.bf16.mxu0 0
        %879 = vmatmul.mubr.bf16.gmra.mrb[0].mxu0 %v524
        %v880 = vpop.f32.mrb[0].mxu0
        %v881 = vadd.f32 %v495, %v880
        %v882 = vpop.f32.mrb[0].mxu0
        %v883 = vpop.f32.mrb[0].mxu0
        %v884 = vadd.f32 %v500, %v883
        %v885 = vpop.f32.mrb[0].mxu0
        %886 = vmatprep.mubr.bf16.mxu0 0
        %887 = vmatmul.mubr.bf16.gmra.mrb[0].mxu0 %v527
        %v888 = vpop.f32.mrb[0].mxu0
        %v889 = vadd.f32 %v505, %v888
        %v890 = vpop.f32.mrb[0].mxu0
        %v891 = vpop.f32.mrb[0].mxu0
        %v892 = vadd.f32 %v510, %v891
        %v893 = vpop.f32.mrb[0].mxu0
        %894 = vdwg.mxu0
        %v895 = vmax.f32 %v881, 0.0
        %v896 = vmax.f32 %v884, 0.0
        %v897 = vmax.f32 %v889, 0.0
        %v898 = vmax.f32 %v892, 0.0
        %v899 = vmax.f32 %v792, %v895
        %v900 = vmax.f32 %v793, %v896
        %v901 = vmax.f32 %v794, %v897
        %v902 = vmax.f32 %v795, %v898
        %s903 = scalar_lea.vmem %s337, 16 [#allocation3]
        %v904 = vld [vmem:[%s903] sm:$0xf]
        %v905 = vsub.bf16 %v904, %v407
        %v907 = vand.u32 %v905, %v444
        %909 = vmatprep.subr.bf16.mxu0 0
        %910 = vmatpush1.bf16.msra.mxu0 %v907
        %911 = vmatprep.subr.bf16.mxu0 0
        %912 = vmatpush1.bf16.msra.mxu0 0
        %913 = vmatprep.subr.bf16.mxu0 0
        %914 = vmatpush1.bf16.msra.mxu0 0
        %915 = vmatprep.subr.bf16.mxu0 0
        %916 = vmatpush1.bf16.msra.mxu0 0
        %917 = vmatprep.subr.bf16.mxu0 0
        %918 = vmatpush1.bf16.msra.mxu0 0
        %919 = vmatprep.subr.bf16.mxu0 0
        %920 = vmatpush1.bf16.msra.mxu0 0
        %921 = vmatprep.subr.bf16.mxu0 0
        %922 = vmatpush1.bf16.msra.mxu0 0
        %923 = vmatprep.subr.bf16.mxu0 0
        %924 = vmatpush1.bf16.msra.mxu0 0
        %925 = vmatprep.subr.bf16.mxu0 0
        %926 = vmatpush1.bf16.msra.mxu0 0
        %927 = vmatprep.subr.bf16.mxu0 0
        %928 = vmatpush1.bf16.msra.mxu0 0
        %929 = vmatprep.subr.bf16.mxu0 0
        %930 = vmatpush1.bf16.msra.mxu0 0
        %931 = vmatprep.subr.bf16.mxu0 0
        %932 = vmatpush1.bf16.msra.mxu0 0
        %933 = vmatprep.subr.bf16.mxu0 0
        %934 = vmatpush1.bf16.msra.mxu0 0
        %935 = vmatprep.subr.bf16.mxu0 0
        %936 = vmatpush1.bf16.msra.mxu0 0
        %937 = vmatprep.subr.bf16.mxu0 0
        %938 = vmatpush1.bf16.msra.mxu0 0
        %939 = vmatprep.subr.bf16.mxu0 0
        %940 = vmatpush1.bf16.msra.mxu0 0
        %941 = vmatprep.mubr.bf16.mxu0 0
        %942 = vmatmul.mubr.bf16.gmra.mrb[0].mxu0 %v439
        %v943 = vpop.f32.mrb[0].mxu0
        %v944 = vadd.f32 %v425, %v943
        %v945 = vpop.f32.mrb[0].mxu0
        %v946 = vpop.f32.mrb[0].mxu0
        %v947 = vadd.f32 %v430, %v946
        %v948 = vpop.f32.mrb[0].mxu0
        %949 = vdwg.mxu0
        %v950 = vmax.f32 %v944, 0.0
        %v951 = vmax.f32 %v947, 0.0
        %v952 = vpack.c.bf16 %v951, %v950
        %953 = vmatprep.subr.bf16.mxu0 0
        %954 = vmatpush1.bf16.msra.mxu0 %v952
        %955 = vmatprep.subr.bf16.mxu0 0
        %956 = vmatpush1.bf16.msra.mxu0 0
        %957 = vmatprep.subr.bf16.mxu0 0
        %958 = vmatpush1.bf16.msra.mxu0 0
        %959 = vmatprep.subr.bf16.mxu0 0
        %960 = vmatpush1.bf16.msra.mxu0 0
        %961 = vmatprep.subr.bf16.mxu0 0
        %962 = vmatpush1.bf16.msra.mxu0 0
        %963 = vmatprep.subr.bf16.mxu0 0
        %964 = vmatpush1.bf16.msra.mxu0 0
        %965 = vmatprep.subr.bf16.mxu0 0
        %966 = vmatpush1.bf16.msra.mxu0 0
        %967 = vmatprep.subr.bf16.mxu0 0
        %968 = vmatpush1.bf16.msra.mxu0 0
        %969 = vmatprep.subr.bf16.mxu0 0
        %970 = vmatpush1.bf16.msra.mxu0 0
        %971 = vmatprep.subr.bf16.mxu0 0
        %972 = vmatpush1.bf16.msra.mxu0 0
        %973 = vmatprep.subr.bf16.mxu0 0
        %974 = vmatpush1.bf16.msra.mxu0 0
        %975 = vmatprep.subr.bf16.mxu0 0
        %976 = vmatpush1.bf16.msra.mxu0 0
        %977 = vmatprep.subr.bf16.mxu0 0
        %978 = vmatpush1.bf16.msra.mxu0 0
        %979 = vmatprep.subr.bf16.mxu0 0
        %980 = vmatpush1.bf16.msra.mxu0 0
        %981 = vmatprep.subr.bf16.mxu0 0
        %982 = vmatpush1.bf16.msra.mxu0 0
        %983 = vmatprep.subr.bf16.mxu0 0
        %984 = vmatpush1.bf16.msra.mxu0 0
        %985 = vmatprep.mubr.bf16.mxu0 0
        %986 = vmatmul.mubr.bf16.gmra.mrb[0].mxu0 %v524
        %v987 = vpop.f32.mrb[0].mxu0
        %v988 = vadd.f32 %v495, %v987
        %v989 = vpop.f32.mrb[0].mxu0
        %v990 = vpop.f32.mrb[0].mxu0
        %v991 = vadd.f32 %v500, %v990
        %v992 = vpop.f32.mrb[0].mxu0
        %993 = vmatprep.mubr.bf16.mxu0 0
        %994 = vmatmul.mubr.bf16.gmra.mrb[0].mxu0 %v527
        %v995 = vpop.f32.mrb[0].mxu0
        %v996 = vadd.f32 %v505, %v995
        %v997 = vpop.f32.mrb[0].mxu0
        %v998 = vpop.f32.mrb[0].mxu0
        %v999 = vadd.f32 %v510, %v998
        %v1000 = vpop.f32.mrb[0].mxu0
        %1001 = vdwg.mxu0
        %v1002 = vmax.f32 %v988, 0.0
        %v1003 = vmax.f32 %v991, 0.0
        %v1004 = vmax.f32 %v996, 0.0
        %v1005 = vmax.f32 %v999, 0.0
        %v1006 = vmax.f32 %v899, %v1002
        %v1007 = vmax.f32 %v900, %v1003
        %v1008 = vmax.f32 %v901, %v1004
        %v1009 = vmax.f32 %v902, %v1005
        %s1010 = scalar_lea.vmem %s337, 20 [#allocation3]
        %v1011 = vld [vmem:[%s1010] sm:$0xf]
        %v1012 = vsub.bf16 %v1011, %v407
        %v1014 = vand.u32 %v1012, %v444
        %1016 = vmatprep.subr.bf16.mxu0 0
        %1017 = vmatpush1.bf16.msra.mxu0 %v1014
        %1018 = vmatprep.subr.bf16.mxu0 0
        %1019 = vmatpush1.bf16.msra.mxu0 0
        %1020 = vmatprep.subr.bf16.mxu0 0
        %1021 = vmatpush1.bf16.msra.mxu0 0
        %1022 = vmatprep.subr.bf16.mxu0 0
        %1023 = vmatpush1.bf16.msra.mxu0 0
        %1024 = vmatprep.subr.bf16.mxu0 0
        %1025 = vmatpush1.bf16.msra.mxu0 0
        %1026 = vmatprep.subr.bf16.mxu0 0
        %1027 = vmatpush1.bf16.msra.mxu0 0
        %1028 = vmatprep.subr.bf16.mxu0 0
        %1029 = vmatpush1.bf16.msra.mxu0 0
        %1030 = vmatprep.subr.bf16.mxu0 0
        %1031 = vmatpush1.bf16.msra.mxu0 0
        %1032 = vmatprep.subr.bf16.mxu0 0
        %1033 = vmatpush1.bf16.msra.mxu0 0
        %1034 = vmatprep.subr.bf16.mxu0 0
        %1035 = vmatpush1.bf16.msra.mxu0 0
        %1036 = vmatprep.subr.bf16.mxu0 0
        %1037 = vmatpush1.bf16.msra.mxu0 0
        %1038 = vmatprep.subr.bf16.mxu0 0
        %1039 = vmatpush1.bf16.msra.mxu0 0
        %1040 = vmatprep.subr.bf16.mxu0 0
        %1041 = vmatpush1.bf16.msra.mxu0 0
        %1042 = vmatprep.subr.bf16.mxu0 0
        %1043 = vmatpush1.bf16.msra.mxu0 0
        %1044 = vmatprep.subr.bf16.mxu0 0
        %1045 = vmatpush1.bf16.msra.mxu0 0
        %1046 = vmatprep.subr.bf16.mxu0 0
        %1047 = vmatpush1.bf16.msra.mxu0 0
        %1048 = vmatprep.mubr.bf16.mxu0 0
        %1049 = vmatmul.mubr.bf16.gmra.mrb[0].mxu0 %v439
        %v1050 = vpop.f32.mrb[0].mxu0
        %v1051 = vadd.f32 %v425, %v1050
        %v1052 = vpop.f32.mrb[0].mxu0
        %v1053 = vpop.f32.mrb[0].mxu0
        %v1054 = vadd.f32 %v430, %v1053
        %v1055 = vpop.f32.mrb[0].mxu0
        %1056 = vdwg.mxu0
        %v1057 = vmax.f32 %v1051, 0.0
        %v1058 = vmax.f32 %v1054, 0.0
        %v1059 = vpack.c.bf16 %v1058, %v1057
        %1060 = vmatprep.subr.bf16.mxu0 0
        %1061 = vmatpush1.bf16.msra.mxu0 %v1059
        %1062 = vmatprep.subr.bf16.mxu0 0
        %1063 = vmatpush1.bf16.msra.mxu0 0
        %1064 = vmatprep.subr.bf16.mxu0 0
        %1065 = vmatpush1.bf16.msra.mxu0 0
        %1066 = vmatprep.subr.bf16.mxu0 0
        %1067 = vmatpush1.bf16.msra.mxu0 0
        %1068 = vmatprep.subr.bf16.mxu0 0
        %1069 = vmatpush1.bf16.msra.mxu0 0
        %1070 = vmatprep.subr.bf16.mxu0 0
        %1071 = vmatpush1.bf16.msra.mxu0 0
        %1072 = vmatprep.subr.bf16.mxu0 0
        %1073 = vmatpush1.bf16.msra.mxu0 0
        %1074 = vmatprep.subr.bf16.mxu0 0
        %1075 = vmatpush1.bf16.msra.mxu0 0
        %1076 = vmatprep.subr.bf16.mxu0 0
        %1077 = vmatpush1.bf16.msra.mxu0 0
        %1078 = vmatprep.subr.bf16.mxu0 0
        %1079 = vmatpush1.bf16.msra.mxu0 0
        %1080 = vmatprep.subr.bf16.mxu0 0
        %1081 = vmatpush1.bf16.msra.mxu0 0
        %1082 = vmatprep.subr.bf16.mxu0 0
        %1083 = vmatpush1.bf16.msra.mxu0 0
        %1084 = vmatprep.subr.bf16.mxu0 0
        %1085 = vmatpush1.bf16.msra.mxu0 0
        %1086 = vmatprep.subr.bf16.mxu0 0
        %1087 = vmatpush1.bf16.msra.mxu0 0
        %1088 = vmatprep.subr.bf16.mxu0 0
        %1089 = vmatpush1.bf16.msra.mxu0 0
        %1090 = vmatprep.subr.bf16.mxu0 0
        %1091 = vmatpush1.bf16.msra.mxu0 0
        %1092 = vmatprep.mubr.bf16.mxu0 0
        %1093 = vmatmul.mubr.bf16.gmra.mrb[0].mxu0 %v524
        %v1094 = vpop.f32.mrb[0].mxu0
        %v1095 = vadd.f32 %v495, %v1094
        %v1096 = vpop.f32.mrb[0].mxu0
        %v1097 = vpop.f32.mrb[0].mxu0
        %v1098 = vadd.f32 %v500, %v1097
        %v1099 = vpop.f32.mrb[0].mxu0
        %1100 = vmatprep.mubr.bf16.mxu0 0
        %1101 = vmatmul.mubr.bf16.gmra.mrb[0].mxu0 %v527
        %v1102 = vpop.f32.mrb[0].mxu0
        %v1103 = vadd.f32 %v505, %v1102
        %v1104 = vpop.f32.mrb[0].mxu0
        %v1105 = vpop.f32.mrb[0].mxu0
        %v1106 = vadd.f32 %v510, %v1105
        %v1107 = vpop.f32.mrb[0].mxu0
        %1108 = vdwg.mxu0
        %v1109 = vmax.f32 %v1095, 0.0
        %v1110 = vmax.f32 %v1098, 0.0
        %v1111 = vmax.f32 %v1103, 0.0
        %v1112 = vmax.f32 %v1106, 0.0
        %v1113 = vmax.f32 %v1006, %v1109
        %v1114 = vmax.f32 %v1007, %v1110
        %v1115 = vmax.f32 %v1008, %v1111
        %v1116 = vmax.f32 %v1009, %v1112
        %s1117 = scalar_lea.vmem %s337, 24 [#allocation3]
        %v1118 = vld [vmem:[%s1117] sm:$0xf]
        %v1119 = vsub.bf16 %v1118, %v407
        %v1121 = vand.u32 %v1119, %v444
        %1123 = vmatprep.subr.bf16.mxu0 0
        %1124 = vmatpush1.bf16.msra.mxu0 %v1121
        %1125 = vmatprep.subr.bf16.mxu0 0
        %1126 = vmatpush1.bf16.msra.mxu0 0
        %1127 = vmatprep.subr.bf16.mxu0 0
        %1128 = vmatpush1.bf16.msra.mxu0 0
        %1129 = vmatprep.subr.bf16.mxu0 0
        %1130 = vmatpush1.bf16.msra.mxu0 0
        %1131 = vmatprep.subr.bf16.mxu0 0
        %1132 = vmatpush1.bf16.msra.mxu0 0
        %1133 = vmatprep.subr.bf16.mxu0 0
        %1134 = vmatpush1.bf16.msra.mxu0 0
        %1135 = vmatprep.subr.bf16.mxu0 0
        %1136 = vmatpush1.bf16.msra.mxu0 0
        %1137 = vmatprep.subr.bf16.mxu0 0
        %1138 = vmatpush1.bf16.msra.mxu0 0
        %1139 = vmatprep.subr.bf16.mxu0 0
        %1140 = vmatpush1.bf16.msra.mxu0 0
        %1141 = vmatprep.subr.bf16.mxu0 0
        %1142 = vmatpush1.bf16.msra.mxu0 0
        %1143 = vmatprep.subr.bf16.mxu0 0
        %1144 = vmatpush1.bf16.msra.mxu0 0
        %1145 = vmatprep.subr.bf16.mxu0 0
        %1146 = vmatpush1.bf16.msra.mxu0 0
        %1147 = vmatprep.subr.bf16.mxu0 0
        %1148 = vmatpush1.bf16.msra.mxu0 0
        %1149 = vmatprep.subr.bf16.mxu0 0
        %1150 = vmatpush1.bf16.msra.mxu0 0
        %1151 = vmatprep.subr.bf16.mxu0 0
        %1152 = vmatpush1.bf16.msra.mxu0 0
        %1153 = vmatprep.subr.bf16.mxu0 0
        %1154 = vmatpush1.bf16.msra.mxu0 0
        %1155 = vmatprep.mubr.bf16.mxu0 0
        %1156 = vmatmul.mubr.bf16.gmra.mrb[0].mxu0 %v439
        %v1157 = vpop.f32.mrb[0].mxu0
        %v1158 = vadd.f32 %v425, %v1157
        %v1159 = vpop.f32.mrb[0].mxu0
        %v1160 = vpop.f32.mrb[0].mxu0
        %v1161 = vadd.f32 %v430, %v1160
        %v1162 = vpop.f32.mrb[0].mxu0
        %1163 = vdwg.mxu0
        %v1164 = vmax.f32 %v1158, 0.0
        %v1165 = vmax.f32 %v1161, 0.0
        %v1166 = vpack.c.bf16 %v1165, %v1164
        %1167 = vmatprep.subr.bf16.mxu0 0
        %1168 = vmatpush1.bf16.msra.mxu0 %v1166
        %1169 = vmatprep.subr.bf16.mxu0 0
        %1170 = vmatpush1.bf16.msra.mxu0 0
        %1171 = vmatprep.subr.bf16.mxu0 0
        %1172 = vmatpush1.bf16.msra.mxu0 0
        %1173 = vmatprep.subr.bf16.mxu0 0
        %1174 = vmatpush1.bf16.msra.mxu0 0
        %1175 = vmatprep.subr.bf16.mxu0 0
        %1176 = vmatpush1.bf16.msra.mxu0 0
        %1177 = vmatprep.subr.bf16.mxu0 0
        %1178 = vmatpush1.bf16.msra.mxu0 0
        %1179 = vmatprep.subr.bf16.mxu0 0
        %1180 = vmatpush1.bf16.msra.mxu0 0
        %1181 = vmatprep.subr.bf16.mxu0 0
        %1182 = vmatpush1.bf16.msra.mxu0 0
        %1183 = vmatprep.subr.bf16.mxu0 0
        %1184 = vmatpush1.bf16.msra.mxu0 0
        %1185 = vmatprep.subr.bf16.mxu0 0
        %1186 = vmatpush1.bf16.msra.mxu0 0
        %1187 = vmatprep.subr.bf16.mxu0 0
        %1188 = vmatpush1.bf16.msra.mxu0 0
        %1189 = vmatprep.subr.bf16.mxu0 0
        %1190 = vmatpush1.bf16.msra.mxu0 0
        %1191 = vmatprep.subr.bf16.mxu0 0
        %1192 = vmatpush1.bf16.msra.mxu0 0
        %1193 = vmatprep.subr.bf16.mxu0 0
        %1194 = vmatpush1.bf16.msra.mxu0 0
        %1195 = vmatprep.subr.bf16.mxu0 0
        %1196 = vmatpush1.bf16.msra.mxu0 0
        %1197 = vmatprep.subr.bf16.mxu0 0
        %1198 = vmatpush1.bf16.msra.mxu0 0
        %1199 = vmatprep.mubr.bf16.mxu0 0
        %1200 = vmatmul.mubr.bf16.gmra.mrb[0].mxu0 %v524
        %v1201 = vpop.f32.mrb[0].mxu0
        %v1202 = vadd.f32 %v495, %v1201
        %v1203 = vpop.f32.mrb[0].mxu0
        %v1204 = vpop.f32.mrb[0].mxu0
        %v1205 = vadd.f32 %v500, %v1204
        %v1206 = vpop.f32.mrb[0].mxu0
        %1207 = vmatprep.mubr.bf16.mxu0 0
        %1208 = vmatmul.mubr.bf16.gmra.mrb[0].mxu0 %v527
        %v1209 = vpop.f32.mrb[0].mxu0
        %v1210 = vadd.f32 %v505, %v1209
        %v1211 = vpop.f32.mrb[0].mxu0
        %v1212 = vpop.f32.mrb[0].mxu0
        %v1213 = vadd.f32 %v510, %v1212
        %v1214 = vpop.f32.mrb[0].mxu0
        %1215 = vdwg.mxu0
        %v1216 = vmax.f32 %v1202, 0.0
        %v1217 = vmax.f32 %v1205, 0.0
        %v1218 = vmax.f32 %v1210, 0.0
        %v1219 = vmax.f32 %v1213, 0.0
        %v1220 = vmax.f32 %v1113, %v1216
        %v1221 = vmax.f32 %v1114, %v1217
        %v1222 = vmax.f32 %v1115, %v1218
        %v1223 = vmax.f32 %v1116, %v1219
        %s1224 = scalar_lea.vmem %s337, 28 [#allocation3]
        %v1225 = vld [vmem:[%s1224] sm:$0xf]
        %v1226 = vsub.bf16 %v1225, %v407
        %v1228 = vand.u32 %v1226, %v444
        %1230 = vmatprep.subr.bf16.mxu0 0
        %1231 = vmatpush1.bf16.msra.mxu0 %v1228
        %1232 = vmatprep.subr.bf16.mxu0 0
        %1233 = vmatpush1.bf16.msra.mxu0 0
        %1234 = vmatprep.subr.bf16.mxu0 0
        %1235 = vmatpush1.bf16.msra.mxu0 0
        %1236 = vmatprep.subr.bf16.mxu0 0
        %1237 = vmatpush1.bf16.msra.mxu0 0
        %1238 = vmatprep.subr.bf16.mxu0 0
        %1239 = vmatpush1.bf16.msra.mxu0 0
        %1240 = vmatprep.subr.bf16.mxu0 0
        %1241 = vmatpush1.bf16.msra.mxu0 0
        %1242 = vmatprep.subr.bf16.mxu0 0
        %1243 = vmatpush1.bf16.msra.mxu0 0
        %1244 = vmatprep.subr.bf16.mxu0 0
        %1245 = vmatpush1.bf16.msra.mxu0 0
        %1246 = vmatprep.subr.bf16.mxu0 0
        %1247 = vmatpush1.bf16.msra.mxu0 0
        %1248 = vmatprep.subr.bf16.mxu0 0
        %1249 = vmatpush1.bf16.msra.mxu0 0
        %1250 = vmatprep.subr.bf16.mxu0 0
        %1251 = vmatpush1.bf16.msra.mxu0 0
        %1252 = vmatprep.subr.bf16.mxu0 0
        %1253 = vmatpush1.bf16.msra.mxu0 0
        %1254 = vmatprep.subr.bf16.mxu0 0
        %1255 = vmatpush1.bf16.msra.mxu0 0
        %1256 = vmatprep.subr.bf16.mxu0 0
        %1257 = vmatpush1.bf16.msra.mxu0 0
        %1258 = vmatprep.subr.bf16.mxu0 0
        %1259 = vmatpush1.bf16.msra.mxu0 0
        %1260 = vmatprep.subr.bf16.mxu0 0
        %1261 = vmatpush1.bf16.msra.mxu0 0
        %1262 = vmatprep.mubr.bf16.mxu0 0
        %1263 = vmatmul.mubr.bf16.gmra.mrb[0].mxu0 %v439
        %v1264 = vpop.f32.mrb[0].mxu0
        %v1265 = vadd.f32 %v425, %v1264
        %v1266 = vpop.f32.mrb[0].mxu0
        %v1267 = vpop.f32.mrb[0].mxu0
        %v1268 = vadd.f32 %v430, %v1267
        %v1269 = vpop.f32.mrb[0].mxu0
        %1270 = vdwg.mxu0
        %v1271 = vmax.f32 %v1265, 0.0
        %v1272 = vmax.f32 %v1268, 0.0
        %v1273 = vpack.c.bf16 %v1272, %v1271
        %1274 = vmatprep.subr.bf16.mxu0 0
        %1275 = vmatpush1.bf16.msra.mxu0 %v1273
        %1276 = vmatprep.subr.bf16.mxu0 0
        %1277 = vmatpush1.bf16.msra.mxu0 0
        %1278 = vmatprep.subr.bf16.mxu0 0
        %1279 = vmatpush1.bf16.msra.mxu0 0
        %1280 = vmatprep.subr.bf16.mxu0 0
        %1281 = vmatpush1.bf16.msra.mxu0 0
        %1282 = vmatprep.subr.bf16.mxu0 0
        %1283 = vmatpush1.bf16.msra.mxu0 0
        %1284 = vmatprep.subr.bf16.mxu0 0
        %1285 = vmatpush1.bf16.msra.mxu0 0
        %1286 = vmatprep.subr.bf16.mxu0 0
        %1287 = vmatpush1.bf16.msra.mxu0 0
        %1288 = vmatprep.subr.bf16.mxu0 0
        %1289 = vmatpush1.bf16.msra.mxu0 0
        %1290 = vmatprep.subr.bf16.mxu0 0
        %1291 = vmatpush1.bf16.msra.mxu0 0
        %1292 = vmatprep.subr.bf16.mxu0 0
        %1293 = vmatpush1.bf16.msra.mxu0 0
        %1294 = vmatprep.subr.bf16.mxu0 0
        %1295 = vmatpush1.bf16.msra.mxu0 0
        %1296 = vmatprep.subr.bf16.mxu0 0
        %1297 = vmatpush1.bf16.msra.mxu0 0
        %1298 = vmatprep.subr.bf16.mxu0 0
        %1299 = vmatpush1.bf16.msra.mxu0 0
        %1300 = vmatprep.subr.bf16.mxu0 0
        %1301 = vmatpush1.bf16.msra.mxu0 0
        %1302 = vmatprep.subr.bf16.mxu0 0
        %1303 = vmatpush1.bf16.msra.mxu0 0
        %1304 = vmatprep.subr.bf16.mxu0 0
        %1305 = vmatpush1.bf16.msra.mxu0 0
        %1306 = vmatprep.mubr.bf16.mxu0 0
        %1307 = vmatmul.mubr.bf16.gmra.mrb[0].mxu0 %v524
        %v1308 = vpop.f32.mrb[0].mxu0
        %v1309 = vadd.f32 %v495, %v1308
        %v1310 = vpop.f32.mrb[0].mxu0
        %v1311 = vpop.f32.mrb[0].mxu0
        %v1312 = vadd.f32 %v500, %v1311
        %v1313 = vpop.f32.mrb[0].mxu0
        %1314 = vmatprep.mubr.bf16.mxu0 0
        %1315 = vmatmul.mubr.bf16.gmra.mrb[0].mxu0 %v527
        %v1316 = vpop.f32.mrb[0].mxu0
        %v1317 = vadd.f32 %v505, %v1316
        %v1318 = vpop.f32.mrb[0].mxu0
        %v1319 = vpop.f32.mrb[0].mxu0
        %v1320 = vadd.f32 %v510, %v1319
        %v1321 = vpop.f32.mrb[0].mxu0
        %1322 = vdwg.mxu0
        %v1323 = vmax.f32 %v1309, 0.0
        %v1324 = vmax.f32 %v1312, 0.0
        %v1325 = vmax.f32 %v1317, 0.0
        %v1326 = vmax.f32 %v1320, 0.0
        %v1327 = vmax.f32 %v1220, %v1323
        %v1328 = vmax.f32 %v1221, %v1324
        %v1329 = vmax.f32 %v1222, %v1325
        %v1330 = vmax.f32 %v1223, %v1326
        %v1331 = vld [vmem:[#allocation2] sm:$0xff]
        %v1332 = vld [vmem:[#allocation2 + $0x8] sm:$0xff]
        %v1333 = vld [vmem:[#allocation2 + $0x10] sm:$0xff]
        %v1334 = vld [vmem:[#allocation2 + $0x18] sm:$0xff]
        %v1335 = vmax.f32 %v1331, %v1327
        %v1336 = vmax.f32 %v1332, %v1328
        %v1337 = vmax.f32 %v1333, %v1329
        %v1338 = vmax.f32 %v1334, %v1330
        %vm1339 = vcmask 64512
        %1340 = vst.msk [vmem:[#allocation2] sm:$0xff] %vm1339, %v1335
        %1341 = vst.msk [vmem:[#allocation2 + $0x8] sm:$0xff] %vm1339, %v1336
        %1342 = vst.msk [vmem:[#allocation2 + $0x10] sm:$0xff] %vm1339, %v1337
        %1343 = vst.msk [vmem:[#allocation2 + $0x18] sm:$0xff] %vm1339, %v1338
        // Predicated region
        $region73: #{tpu_custom_call.1} parent=43 // pred_check
          %p1344 = pneg %p398
        $region74: #{tpu_custom_call.1} parent=43 // pred_check_branch
          %1346 = sbr.rel (%p1344) target = $region76
        $region75: #{tpu_custom_call.1} parent=43 // pred_region
          %v1347 = vld [vmem:[#allocation2] sm:$0xff]
          %v1348 = vld [vmem:[#allocation2 + $0x8] sm:$0xff]
          %v1349 = vld [vmem:[#allocation2 + $0x10] sm:$0xff]
          %v1350 = vld [vmem:[#allocation2 + $0x18] sm:$0xff]
          %1351 = vst.msk [vmem:[%s395] sm:$0xff] %vm1339, %v1347
          %1352 = vst.msk [vmem:[%s395 + $0x8] sm:$0xff] %vm1339, %v1348
          %1353 = vst.msk [vmem:[%s395 + $0x10] sm:$0xff] %vm1339, %v1349
          %1354 = vst.msk [vmem:[%s395 + $0x18] sm:$0xff] %vm1339, %v1350
        $region76: #{tpu_custom_call.1} parent=43 // pred_fallthru
          _
        %s1355 = sand.u32 %s199, 1
        %s1356 = scalar_lea.sflag [#allocation5], %s1355
        %s1357 = sand.u32 %s199, 1
        %s1358 = smul.addr %s1357, 32
        %s1359 = scalar_lea.vmem [#allocation14], %s1358
        // Predicated region
        $region77: #{tpu_custom_call.1} parent=43 // pred_check
          %p1360 = pneg %p209
        $region78: #{tpu_custom_call.1} parent=43 // pred_check_branch
          %1362 = sbr.rel (%p1360) target = $region80
        $region79: #{tpu_custom_call.1} parent=43 // pred_region
          %s1364 = ssub.s32 512, 512
          %1365 = vsyncadd %s1356, %s1364
          %s1366 = smul.addr %s33, 4
          %s1367 = sadd.s32 %s34, %s1366
          %s1368 = smul.addr %s1367, 128
          %s1369 = scalar_lea.hbm %s6, %s1368
          %s1370 = sshll.u32 %s1359, 4
          %s1371 = int_to_ptr.vmem [resolvable:$true] %s1370
          %1376 = dma.vmem_to_hbm [thread:$0]  %s1371, 512, %s1369, %s1356, 128, 128, 8
        $region80: #{tpu_custom_call.1} parent=43 // pred_fallthru
          _
      $region44: #{tpu_custom_call.1} parent=5 // pred_fallthru
        _
      %p1377 = scmp.le.s32.totalorder 2, %s23
      // Predicated region
      $region81: #{tpu_custom_call.1} parent=5 // pred_check
        %p1378 = pneg %p1377
      $region82: #{tpu_custom_call.1} parent=5 // pred_check_branch
        %1380 = sbr.rel (%p1378) target = $region84
      $region83: #{tpu_custom_call.1} parent=5 // pred_region
        %s1381 = ssub.s32 %s23, 2
        // Predicated region
        $region85: #{tpu_custom_call.1} parent=83 // pred_check
          %p1382 = pneg %p215
        $region86: #{tpu_custom_call.1} parent=83 // pred_check_branch
          %1384 = sbr.rel (%p1382) target = $region88
        $region87: #{tpu_custom_call.1} parent=83 // pred_region
          %s1385 = sand.u32 %s200, 1
          %s1386 = scalar_lea.sflag [#allocation5], %s1385
          %s1387 = sand.u32 %s200, 1
          %s1388 = smul.addr %s1387, 32
          %s1389 = scalar_lea.vmem [#allocation14], %s1388
          %1390 = dma.done %s1386, 512
        $region88: #{tpu_custom_call.1} parent=83 // pred_fallthru
          _
      $region84: #{tpu_custom_call.1} parent=5 // pred_fallthru
        _
    $region6: #{tpu_custom_call.1} parent=1 // loop_footer
      %s27 = sadd.s32 1, %s23
    $region7: #{tpu_custom_call.1} parent=1 // loop_footer_branch
      %22 = sbr.rel target = $region3
    $region8: #{tpu_custom_call.1} parent=1 // loop_exit
      _
    %1391 = vsyncpa [#allocation4], 1
    %s1392 = scalar_lea.sflag [#allocation4], 1
    %1393 = vsyncpa %s1392, 1
    %1394 = vsyncpa [#allocation7], 1
    %s1395 = scalar_lea.sflag [#allocation7], 1
    %1396 = vsyncpa %s1395, 1
    %1397 = vsyncpa [#allocation10], 1
    %1398 = vsyncpa [#allocation13], 1
    %1399 = vsyncpa [#allocation5], 1
    %s1400 = scalar_lea.sflag [#allocation5], 1
    %1401 = vsyncpa %s1400, 1

</llo_original>
